<compile_context>
chip_gen: v6e
topology: v6e:2x2x1
jax: 0.10.0
libtpu: 0.0.40
codegen_flags: <defaults>
</compile_context>

<pallas_src>
import math
import functools

import jax
import jax.numpy as jnp
from jax.experimental import pallas as pl
from jax.experimental.pallas import tpu as pltpu


# ----------------------------- filter construction -----------------------------

def _gaussian_1d(size, sigma):
    x = jnp.arange(size, dtype=jnp.float32)
    mean = (size - 1) / 2.0
    g = (1.0 / (sigma * math.sqrt(2.0 * math.pi))) * jnp.exp(-(((x - mean) / sigma) ** 2) / 2.0)
    return g / jnp.sum(g)


def make_gaussian_taps(kernel_size, sigma, dim=2):
    """Normalized 1D gaussian taps per spatial dim (the separable factors)."""
    if isinstance(kernel_size, (int, float)):
        kernel_size = [int(kernel_size)] * dim
    if isinstance(sigma, (int, float)):
        sigma = [float(sigma)] * dim
    assert dim == 2, "only the dim=2 (spatial) path is implemented"
    return _gaussian_1d(kernel_size[0], sigma[0]), _gaussian_1d(kernel_size[1], sigma[1])


def make_gaussian_weight(channels, kernel_size, sigma, dim=2, dtype=jnp.float32):
    """2D normalized gaussian buffer, same math as the PyTorch __init__ (C, K0, K1)."""
    g0, g1 = make_gaussian_taps(kernel_size, sigma, dim)
    k2d = jnp.outer(g0, g1)
    k2d = k2d / jnp.sum(k2d)
    return jnp.broadcast_to(k2d[None], (channels, *k2d.shape)).astype(dtype)


# --------------------------- banded matrices (host side) -----------------------

def _banded_cols(n, taps):
    """B (n, n-K+1) with B[o + k, o] = taps[k]:  (img @ B)[i, o] = sum_k taps[k]*img[i, o+k].
    Only valid output columns are produced (no truncated sums, nothing to trim)."""
    K = int(taps.shape[0])
    no = n - K + 1
    w = jnp.arange(n)[:, None]
    o = jnp.arange(no)[None, :]
    d = w - o
    return jnp.where((d >= 0) & (d < K), taps[jnp.clip(d, 0, K - 1)], 0.0).astype(jnp.float32)


def _banded_rows(n, taps):
    """A (n-K+1, n) with A[o, o + k] = taps[k]:  (A @ img)[o, j] = sum_k taps[k]*img[o+k, j]."""
    return _banded_cols(n, taps).T


# --------------------------------- Pallas kernel --------------------------------

def _smoothing_kernel(x_ref, a_ref, b_ref, o_ref, *, compute_dtype, precision):
    # x_ref: (c_tile, H, W)  a_ref: (Ho, H)  b_ref: (W, Wo)  o_ref: (c_tile, Ho, Wo)
    c_tile, h, w = x_ref.shape
    ho = a_ref.shape[0]
    wo = b_ref.shape[1]

    # One cast for the whole channel tile (not per channel / per tap).
    x2d = x_ref[...].astype(compute_dtype).reshape(c_tile * h, w)
    a = a_ref[...]
    b = b_ref[...]

    # W-direction 1D gaussian: ONE matmul over the leading-dim-collapsed block
    # (fills the MXU M dimension; a single issue/drain instead of c_tile small dots).
    hz = jnp.dot(x2d, b, preferred_element_type=jnp.float32, precision=precision)
    hz = hz.reshape(c_tile, h, wo).astype(compute_dtype)

    # H-direction 1D gaussian: a single batched matmul over the channel tile.
    # A is shared across channels; broadcast once per grid step (hoisted).
    a_b = jnp.broadcast_to(a[None], (c_tile, ho, h))
    out = jax.lax.dot_general(
        a_b, hz,
        dimension_numbers=(((2,), (1,)), ((0,), (0,))),
        preferred_element_type=jnp.float32,
        precision=precision,
    )

    # One slab store of the valid window per grid step.
    o_ref[...] = out.astype(o_ref.dtype)


# ------------------------------ tiling / VMEM sizing -----------------------------

def _vmem_capacity_bytes():
    """Per-generation VMEM capacity (v5e/v6e: 128 MiB, v7x: 64 MiB). Conservative fallback."""
    try:
        return int(pltpu.get_tpu_info().vmem_capacity_bytes)
    except Exception:
        return 64 * 1024 * 1024  # assume the most restrictive modern chip (v7x)


def _block_footprint_bytes(c_tile, H, W, Ho, Wo, in_itemsize, out_itemsize):
    """Resident VMEM for one grid step: double-buffered in/out blocks, the two banded
    operators (double-buffered by the default pipeline), plus the f32 intermediates."""
    f32 = 4
    in_blk = c_tile * H * W * in_itemsize
    out_blk = c_tile * Ho * Wo * out_itemsize
    a_bytes = Ho * H * f32
    b_bytes = W * Wo * f32
    interm = f32 * c_tile * (H * W + H * Wo + Ho * H + Ho * Wo)
    return 2 * (in_blk + out_blk) + 2 * (a_bytes + b_bytes) + interm


def _pick_c_tile(N, C, H, W, Ho, Wo, in_itemsize, out_itemsize, budget_bytes):
    """Largest channel tile (divisor of C) whose per-step footprint fits the budget,
    keeping >= 2 grid steps when N == 1 so v7x's two TensorCores both get work."""
    best = 1
    for d in range(1, C + 1):
        if C % d:
            continue
        if N == 1 and C >= 2 and (C // d) < 2:
            continue
        if _block_footprint_bytes(d, H, W, Ho, Wo, in_itemsize, out_itemsize) <= budget_bytes:
            best = d
    return best


# ------------------------------------ wrapper ------------------------------------

def gaussian_smoothing_2d(x, taps_h, taps_w):
    """x: (N, C, H, W); taps_h: (K0,), taps_w: (K1,) normalized 1D gaussian taps.
    Returns the depthwise valid-padding convolution, shape (N, C, H-K0+1, W-K1+1)."""
    N, C, H, W = x.shape
    K0, K1 = int(taps_h.shape[0]), int(taps_w.shape[0])
    Ho, Wo = H - K0 + 1, W - K1 + 1
    assert Ho > 0 and Wo > 0, "gaussian kernel larger than the image"

    # MXU operand dtype / precision. bf16 inputs go to the MXU directly (single pass,
    # f32 accumulation).  f32 keeps HIGHEST: Mosaic's dot lowering only supports
    # DEFAULT/HIGHEST and DEFAULT (bf16x1) would miss the 2e-5 reference tolerance.
    if x.dtype == jnp.bfloat16:
        compute_dtype, precision = jnp.bfloat16, None
    else:
        compute_dtype, precision = jnp.float32, jax.lax.Precision.HIGHEST

    # Valid-output banded operators: the kernel only ever writes (Ho, Wo).
    a = _banded_rows(H, taps_h.astype(jnp.float32)).astype(compute_dtype)   # (Ho, H)
    b = _banded_cols(W, taps_w.astype(jnp.float32)).astype(compute_dtype)   # (W, Wo)

    # Per-generation VMEM budget and channel tile.
    vmem_cap = _vmem_capacity_bytes()
    budget = int(vmem_cap * 0.70)
    c_tile = _pick_c_tile(N, C, H, W, Ho, Wo,
                          in_itemsize=x.dtype.itemsize,
                          out_itemsize=x.dtype.itemsize,
                          budget_bytes=budget)
    footprint = _block_footprint_bytes(c_tile, H, W, Ho, Wo,
                                       x.dtype.itemsize, x.dtype.itemsize)
    vmem_limit = min(int(vmem_cap * 0.9), max(budget, footprint + (4 << 20)))

    kernel = functools.partial(_smoothing_kernel,
                               compute_dtype=compute_dtype, precision=precision)

    # Advisory cost estimate (banded-matmul MACs x2, real bytes moved).
    flops = 2 * N * C * (H * W * Wo + Ho * H * Wo)
    bytes_accessed = (int(x.size) * x.dtype.itemsize
                      + N * C * Ho * Wo * x.dtype.itemsize
                      + int(a.size) * a.dtype.itemsize
                      + int(b.size) * b.dtype.itemsize)

    return pl.pallas_call(
        kernel,
        out_shape=jax.ShapeDtypeStruct((N, C, Ho, Wo), x.dtype),
        grid_spec=pltpu.PrefetchScalarGridSpec(
            num_scalar_prefetch=0,
            grid=(N, C // c_tile),
            in_specs=[
                # Batch dim squeezed; channels tiled (depthwise => no halo needed).
                pl.BlockSpec((None, c_tile, H, W), lambda n, c: (n, c, 0, 0)),
                pl.BlockSpec((Ho, H), lambda n, c: (0, 0)),
                pl.BlockSpec((W, Wo), lambda n, c: (0, 0)),
            ],
            out_specs=pl.BlockSpec((None, c_tile, Ho, Wo), lambda n, c: (n, c, 0, 0)),
        ),
        compiler_params=pltpu.CompilerParams(
            dimension_semantics=("parallel", "parallel"),
            vmem_limit_bytes=vmem_limit,
        ),
        cost_estimate=pl.CostEstimate(
            flops=flops, transcendentals=0, bytes_accessed=bytes_accessed),
    )(x, a, b)


# ----------------------------------- reference ----------------------------------

def _reference(x, weight2d):
    # Depthwise conv via lax.conv_general_dilated (groups = C), valid padding.
    C = x.shape[1]
    w = weight2d[:, None, :, :]  # (C, 1, K, K) == PyTorch OIHW layout
    return jax.lax.conv_general_dilated(
        x, w,
        window_strides=(1, 1),
        padding="VALID",
        dimension_numbers=("NCHW", "OIHW", "NCHW"),
        feature_group_count=C,
        precision=jax.lax.Precision.HIGHEST,
    )


if __name__ == "__main__":
    N, C, H, W = 2, 4, 16, 16
    kernel_size, sigma = 5, 1.5

    key = jax.random.PRNGKey(0)
    x = jax.random.normal(key, (N, C, H, W), dtype=jnp.float32)

    taps_h, taps_w = make_gaussian_taps(kernel_size, sigma, dim=2)
    weight2d = make_gaussian_weight(C, kernel_size, sigma, dim=2)

    out = gaussian_smoothing_2d(x, taps_h, taps_w)
    out = jax.block_until_ready(out)

    ref = _reference(x, weight2d)
    assert out.shape == ref.shape, (out.shape, ref.shape)
    max_err = float(jnp.max(jnp.abs(out - ref)))
    assert jnp.allclose(out, ref, atol=2e-5, rtol=2e-5), max_err

    print("KERNEL_OK")
</pallas_src>

<mosaic_0001>
module attributes {stable_mosaic.version = 11 : i64} {
  func.func @_smoothing_kernel(%arg0: i32, %arg1: i32, %arg2: memref<1x4x16x16xf32, #tpu.memory_space<vmem>>, %arg3: memref<12x16xf32, #tpu.memory_space<vmem>>, %arg4: memref<16x12xf32, #tpu.memory_space<vmem>>, %arg5: memref<1x4x12x12xf32, #tpu.memory_space<vmem>>) attributes {dimension_semantics = [#tpu.dimension_semantics<parallel>, #tpu.dimension_semantics<parallel>], iteration_bounds = array<i64: 2, 1>, scalar_prefetch = 0 : i64, scratch_operands = 0 : i64, tpu.core_type = #tpu.core_type<tc>, window_params = [{transform_indices = @transform_0, window_bounds = array<i64: 1, 4, 16, 16>}, {pipeline_mode = #tpu.pipeline_mode<synchronous>, transform_indices = @transform_1, window_bounds = array<i64: 12, 16>}, {pipeline_mode = #tpu.pipeline_mode<synchronous>, transform_indices = @transform_2, window_bounds = array<i64: 16, 12>}, {transform_indices = @transform_3, window_bounds = array<i64: 1, 4, 12, 12>}]} {
    %c0 = arith.constant 0 : index
    %c0_0 = arith.constant 0 : index
    %c0_1 = arith.constant 0 : index
    %c0_2 = arith.constant 0 : index
    %0 = vector.load %arg2[%c0, %c0_0, %c0_1, %c0_2] : memref<1x4x16x16xf32, #tpu.memory_space<vmem>>, vector<1x4x16x16xf32>
    %1 = vector.shape_cast %0 : vector<1x4x16x16xf32> to vector<4x16x16xf32>
    %2 = vector.shape_cast %1 : vector<4x16x16xf32> to vector<64x16xf32>
    %c0_3 = arith.constant 0 : index
    %c0_4 = arith.constant 0 : index
    %3 = vector.load %arg3[%c0_3, %c0_4] : memref<12x16xf32, #tpu.memory_space<vmem>>, vector<12x16xf32>
    %c0_5 = arith.constant 0 : index
    %c0_6 = arith.constant 0 : index
    %4 = vector.load %arg4[%c0_5, %c0_6] : memref<16x12xf32, #tpu.memory_space<vmem>>, vector<16x12xf32>
    %cst = arith.constant dense<0.000000e+00> : vector<64x12xf32>
    %5 = tpu.matmul %2, %4, %cst {dimension_numbers = #tpu.dot_dimension_numbers<[1], [0], [0], [1], [0, 0, 1, 1], [], []>, precision = #tpu.contract_precision<fp32>} : vector<64x16xf32>, vector<16x12xf32>, vector<64x12xf32> -> vector<64x12xf32>
    %6 = vector.shape_cast %5 : vector<64x12xf32> to vector<4x16x12xf32>
    %7 = vector.shape_cast %3 : vector<12x16xf32> to vector<1x12x16xf32>
    %8 = vector.shape_cast %7 : vector<1x12x16xf32> to vector<1x12x16xf32>
    %9 = vector.broadcast %8 : vector<1x12x16xf32> to vector<4x12x16xf32>
    %cst_7 = arith.constant dense<0.000000e+00> : vector<4x12x12xf32>
    %10 = tpu.matmul %9, %6, %cst_7 {dimension_numbers = #tpu.dot_dimension_numbers<[2], [1], [1], [2], [0, 0, 0, 1, 1, 2], [0], [0]>, precision = #tpu.contract_precision<fp32>} : vector<4x12x16xf32>, vector<4x16x12xf32>, vector<4x12x12xf32> -> vector<4x12x12xf32>
    %c0_8 = arith.constant 0 : index
    %c0_9 = arith.constant 0 : index
    %c0_10 = arith.constant 0 : index
    %c0_11 = arith.constant 0 : index
    %11 = vector.load %arg5[%c0_8, %c0_9, %c0_10, %c0_11] : memref<1x4x12x12xf32, #tpu.memory_space<vmem>>, vector<1x4x12x12xf32>
    %12 = vector.shape_cast %11 : vector<1x4x12x12xf32> to vector<4x12x12xf32>
    %13 = vector.shape_cast %10 : vector<4x12x12xf32> to vector<1x4x12x12xf32>
    tpu.vector_store %arg5[%c0_8, %c0_9, %c0_10, %c0_11], %13 {strides = array<i32>} : memref<1x4x12x12xf32, #tpu.memory_space<vmem>>, vector<1x4x12x12xf32>,
    return
  }
  func.func @transform_0(%arg0: i32, %arg1: i32) -> (i32, i32, i32, i32) {
    %c0_i32 = arith.constant 0 : i32
    %c0_i32_0 = arith.constant 0 : i32
    %c0_i32_1 = arith.constant 0 : i32
    return %arg0, %arg1, %c0_i32, %c0_i32_0 : i32, i32, i32, i32
  }
  func.func @transform_1(%arg0: i32, %arg1: i32) -> (i32, i32) {
    %c0_i32 = arith.constant 0 : i32
    %c0_i32_0 = arith.constant 0 : i32
    %c0_i32_1 = arith.constant 0 : i32
    return %c0_i32, %c0_i32_0 : i32, i32
  }
  func.func @transform_2(%arg0: i32, %arg1: i32) -> (i32, i32) {
    %c0_i32 = arith.constant 0 : i32
    %c0_i32_0 = arith.constant 0 : i32
    %c0_i32_1 = arith.constant 0 : i32
    return %c0_i32, %c0_i32_0 : i32, i32
  }
  func.func @transform_3(%arg0: i32, %arg1: i32) -> (i32, i32, i32, i32) {
    %c0_i32 = arith.constant 0 : i32
    %c0_i32_0 = arith.constant 0 : i32
    %c0_i32_1 = arith.constant 0 : i32
    return %arg0, %arg1, %c0_i32, %c0_i32_0 : i32, i32, i32, i32
  }
}

</mosaic_0001>

<llo_original>
// kernel: tpu_custom_call.1
$region0: #{tpu_custom_call.1}
  #allocation0 [shape = 'u32[]', space=smem, size = 0x4, offset = 0x4, fixed_abs, tag = 'smem constant byte address 0x4 - core index']
  #allocation1 [shape = 'u32[144,128]{1,0:T(1,128)}', space=vmem, size = 0x12000, scoped, tag = 'internal scratch']
  %s0 = inlined_call_operand.hbm [shape: f32[2,4,16,16], index: 0, kind: input, shape index: {}]
  %s1 = inlined_call_operand.hbm [shape: f32[12,16], index: 1, kind: input, shape index: {}]
  %s2 = inlined_call_operand.hbm [shape: f32[16,12], index: 2, kind: input, shape index: {}]
  %s3 = inlined_call_operand.vmem [shape: f32[2,4,12,12], index: 3, kind: output, shape index: {}]
  %s4 = sld [smem:[#allocation0]]
  $region57: #{tpu_custom_call.1} parent=0
    _
  %s6 = ssub.s32 1, %s4
  %s7 = scalar_select 0, %s6, %s4
  $region1: #{tpu_custom_call.1} parent=0
    #allocation2 [shape = 'u8[65536]{0}', space=vmem, size = 0x10000, scoped, tag = 'input window, operand 0']
    #allocation3 [shape = 's32[2]{0}', space=sflag, size = 0x8, scoped, tag = 'scoped memory for tpu_custom_call.1']
    #allocation4 [shape = 'u8[8192]{0}', space=vmem, size = 0x2000, scoped, tag = 'input window, operand 1, single buffered']
    #allocation5 [shape = 's32[1]{0}', space=sflag, size = 0x4, scoped, tag = 'scoped memory for tpu_custom_call.1']
    #allocation6 [shape = 'u8[8192]{0}', space=vmem, size = 0x2000, scoped, tag = 'input window, operand 2, single buffered']
    %8 = vsyncpa [#allocation3], 0
    %s9 = scalar_lea.sflag [#allocation3], 1
    %10 = vsyncpa %s9, 0
    %11 = vsyncpa [#allocation5], 0
    loop: start=0, step=1, limit=4
    $region2: #{tpu_custom_call.1} parent=1 // loop_pre_header
      _
    $region3: #{tpu_custom_call.1} parent=1 // loop_header
      %s13 = sphi 0, %s17
      %p14 = scmp.ge.s32.totalorder %s13, 4
      %s20 = sphi 0, %s32
      %s21 = sphi 0, %s28
      %s22 = sphi 0, %s20
      %s23 = sphi 0, %s21
      %s24 = sphi 0, %s22
      %s25 = sphi 0, %s23
      %s37 = sphi 0, %s39
      %s40 = sphi 0, %s37
      %s41 = sphi 0, %s40
      %s57 = sphi 0, %s41
      %s61 = sphi 0, %s61
      %s63 = sphi 0, %s61
      %s64 = sphi 0, %s63
      %s78 = sphi 0, %s64
      %s82 = sphi 0, %s82
      %s84 = sphi 0, %s82
      %s85 = sphi 0, %s84
      %s99 = sphi 0, %s85
      %s107 = sphi 0, %s109
      %s110 = sphi 0, %s107
      %s111 = sphi 0, %s110
      %s127 = sphi 0, %s111
    $region4: #{tpu_custom_call.1} parent=1 // loop_header_branch
      %16 = sbr.rel (%p14) target = $region8
    $region5: #{tpu_custom_call.1} parent=1 // loop_body
      %s18 = ssub.s32 %s13, 1
      %s19 = ssub.s32 %s13, 2
      %s26 = sadd.s32 1, %s21
      %p27 = scmp.ge.s32.totalorder %s26, 1
      %s28 = scalar_select %p27, 0, %s26
      %s29 = sadd.s32 1, %s20
      %s30 = scalar_select %p27, %s29, %s20
      %p31 = scmp.ge.s32.totalorder %s30, 2
      %s32 = scalar_select %p31, 0, %s30
      %s33 = ssub.s32 %s20, %s32
      %s34 = ssub.s32 %s21, %s28
      %s35 = sor.u32 %s33, %s34
      %p36 = scmp.eq.s32.totalorder %s35, 0
      %s38 = sadd.s32 %s37, 1
      %s39 = scalar_select %p36, %s37, %s38
      %p42 = pneg %p36
      %p43 = scmp.eq.s32.totalorder %s13, 1
      %p44 = por %p42, %p43
      %p45 = scmp.ne.s32.totalorder %s37, %s40
      %p46 = scmp.eq.s32.totalorder %s13, 0
      %p47 = por %p45, %p46
      %p48 = scmp.ne.s32.totalorder %s37, %s40
      %p49 = scmp.eq.s32.totalorder %s18, 1
      %p50 = por %p48, %p49
      %p51 = scmp.ne.s32.totalorder %s40, %s41
      %p52 = scmp.eq.s32.totalorder %s18, 0
      %p53 = por %p51, %p52
      %p54 = scmp.ne.s32.totalorder %s40, %s41
      %p55 = scmp.eq.s32.totalorder %s19, 1
      %p56 = por %p54, %p55
      %p58 = scmp.ne.s32.totalorder %s41, %s57
      %p59 = scmp.eq.s32.totalorder %s19, 0
      %p60 = por %p58, %p59
      %s62 = sadd.s32 %s61, 1
      %p65 = scmp.eq.s32.totalorder %s13, 1
      %p66 = scmp.ne.s32.totalorder %s61, %s63
      %p67 = scmp.eq.s32.totalorder %s13, 0
      %p68 = por %p66, %p67
      %p69 = scmp.ne.s32.totalorder %s61, %s63
      %p70 = scmp.eq.s32.totalorder %s18, 1
      %p71 = por %p69, %p70
      %p72 = scmp.ne.s32.totalorder %s63, %s64
      %p73 = scmp.eq.s32.totalorder %s18, 0
      %p74 = por %p72, %p73
      %p75 = scmp.ne.s32.totalorder %s63, %s64
      %p76 = scmp.eq.s32.totalorder %s19, 1
      %p77 = por %p75, %p76
      %p79 = scmp.ne.s32.totalorder %s64, %s78
      %p80 = scmp.eq.s32.totalorder %s19, 0
      %p81 = por %p79, %p80
      %s83 = sadd.s32 %s82, 1
      %p86 = scmp.eq.s32.totalorder %s13, 1
      %p87 = scmp.ne.s32.totalorder %s82, %s84
      %p88 = scmp.eq.s32.totalorder %s13, 0
      %p89 = por %p87, %p88
      %p90 = scmp.ne.s32.totalorder %s82, %s84
      %p91 = scmp.eq.s32.totalorder %s18, 1
      %p92 = por %p90, %p91
      %p93 = scmp.ne.s32.totalorder %s84, %s85
      %p94 = scmp.eq.s32.totalorder %s18, 0
      %p95 = por %p93, %p94
      %p96 = scmp.ne.s32.totalorder %s84, %s85
      %p97 = scmp.eq.s32.totalorder %s19, 1
      %p98 = por %p96, %p97
      %p100 = scmp.ne.s32.totalorder %s85, %s99
      %p101 = scmp.eq.s32.totalorder %s19, 0
      %p102 = por %p100, %p101
      %s103 = ssub.s32 %s20, %s32
      %s104 = ssub.s32 %s21, %s28
      %s105 = sor.u32 %s103, %s104
      %p106 = scmp.eq.s32.totalorder %s105, 0
      %s108 = sadd.s32 %s107, 1
      %s109 = scalar_select %p106, %s107, %s108
      %p112 = pneg %p106
      %p113 = scmp.eq.s32.totalorder %s13, 1
      %p114 = por %p112, %p113
      %p115 = scmp.ne.s32.totalorder %s107, %s110
      %p116 = scmp.eq.s32.totalorder %s13, 0
      %p117 = por %p115, %p116
      %p118 = scmp.ne.s32.totalorder %s107, %s110
      %p119 = scmp.eq.s32.totalorder %s18, 1
      %p120 = por %p118, %p119
      %p121 = scmp.ne.s32.totalorder %s110, %s111
      %p122 = scmp.eq.s32.totalorder %s18, 0
      %p123 = por %p121, %p122
      %p124 = scmp.ne.s32.totalorder %s110, %s111
      %p125 = scmp.eq.s32.totalorder %s19, 1
      %p126 = por %p124, %p125
      %p128 = scmp.ne.s32.totalorder %s111, %s127
      %p129 = scmp.eq.s32.totalorder %s19, 0
      %p130 = por %p128, %p129
      %p131 = scmp.le.s32.totalorder 1, %s13
      %p132 = scmp.lt.s32.totalorder %s13, 3
      %p133 = pnand %p131, %p132
      %p134 = pneg %p133
      // Predicated region
      $region9: #{tpu_custom_call.1} parent=5 // pred_check
        _
      $region10: #{tpu_custom_call.1} parent=5 // pred_check_branch
        %136 = sbr.rel (%p133) target = $region12
      $region11: #{tpu_custom_call.1} parent=5 // pred_region
        %s137 = ssub.s32 %s13, 1
        // Predicated region
        $region13: #{tpu_custom_call.1} parent=11 // pred_check
          %p138 = pneg %p74
        $region14: #{tpu_custom_call.1} parent=11 // pred_check_branch
          %140 = sbr.rel (%p138) target = $region16
        $region15: #{tpu_custom_call.1} parent=11 // pred_region
          %s142 = ssub.s32 256, 256
          %143 = vsyncadd [#allocation5], %s142
          %s144 = sshll.u32 [#allocation4], 4
          %s145 = int_to_ptr.vmem [resolvable:$true] %s144
          %150 = dma.hbm_to_vmem [thread:$0]  %s1, 256, %s145, [#allocation5], 128, 128, 8
        $region16: #{tpu_custom_call.1} parent=11 // pred_fallthru
          _
        // Predicated region
        $region17: #{tpu_custom_call.1} parent=11 // pred_check
          %p151 = pneg %p95
        $region18: #{tpu_custom_call.1} parent=11 // pred_check_branch
          %153 = sbr.rel (%p151) target = $region20
        $region19: #{tpu_custom_call.1} parent=11 // pred_region
          %s155 = ssub.s32 256, 256
          %156 = vsyncadd [#allocation5], %s155
          %s157 = sshll.u32 [#allocation6], 4
          %s158 = int_to_ptr.vmem [resolvable:$true] %s157
          %163 = dma.hbm_to_vmem [thread:$0]  %s2, 256, %s158, [#allocation5], 128, 128, 8
        $region20: #{tpu_custom_call.1} parent=11 // pred_fallthru
          _
      $region12: #{tpu_custom_call.1} parent=5 // pred_fallthru
        _
      %p164 = scmp.lt.s32.totalorder %s13, 2
      // Predicated region
      $region21: #{tpu_custom_call.1} parent=5 // pred_check
        %p165 = pneg %p164
      $region22: #{tpu_custom_call.1} parent=5 // pred_check_branch
        %167 = sbr.rel (%p165) target = $region24
      $region23: #{tpu_custom_call.1} parent=5 // pred_region
        // Predicated region
        $region25: #{tpu_custom_call.1} parent=23 // pred_check
          %p168 = pneg %p47
        $region26: #{tpu_custom_call.1} parent=23 // pred_check_branch
          %170 = sbr.rel (%p168) target = $region28
        $region27: #{tpu_custom_call.1} parent=23 // pred_region
          %s171 = sand.u32 %s37, 1
          %s172 = scalar_lea.sflag [#allocation3], %s171
          %s173 = sand.u32 %s37, 1
          %s174 = smul.addr %s173, 64
          %s175 = scalar_lea.vmem [#allocation2], %s174
          %s176 = smul.u32 4, %s21
          %s178 = ssub.s32 1024, 1024
          %179 = vsyncadd %s172, %s178
          %s180 = smul.addr %s176, 2
          %s181 = smul.addr %s20, 8
          %s182 = sadd.s32 %s180, %s181
          %s183 = smul.addr %s182, 128
          %s184 = scalar_lea.hbm %s0, %s183
          %s185 = sshll.u32 %s175, 4
          %s186 = int_to_ptr.vmem [resolvable:$true] %s185
          %191 = dma.hbm_to_vmem [thread:$0]  %s184, 1024, %s186, %s172, 128, 128, 8
        $region28: #{tpu_custom_call.1} parent=23 // pred_fallthru
          _
      $region24: #{tpu_custom_call.1} parent=5 // pred_fallthru
        _
      %p192 = scmp.le.s32.totalorder 1, %s13
      %p193 = scmp.lt.s32.totalorder %s13, 3
      %p194 = pnand %p192, %p193
      %p195 = pneg %p194
      // Predicated region
      $region29: #{tpu_custom_call.1} parent=5 // pred_check
        _
      $region30: #{tpu_custom_call.1} parent=5 // pred_check_branch
        %197 = sbr.rel (%p194) target = $region32
      $region31: #{tpu_custom_call.1} parent=5 // pred_region
        %s198 = ssub.s32 %s13, 1
        %s199 = sand.u32 %s40, 1
        %s200 = scalar_lea.sflag [#allocation3], %s199
        %s201 = sand.u32 %s40, 1
        %s202 = smul.addr %s201, 64
        %s203 = scalar_lea.vmem [#allocation2], %s202
        // Predicated region
        $region33: #{tpu_custom_call.1} parent=31 // pred_check
          %p204 = pneg %p53
        $region34: #{tpu_custom_call.1} parent=31 // pred_check_branch
          %206 = sbr.rel (%p204) target = $region36
        $region35: #{tpu_custom_call.1} parent=31 // pred_region
          %207 = dma.done %s200, 1024
        $region36: #{tpu_custom_call.1} parent=31 // pred_fallthru
          _
        // Predicated region
        $region37: #{tpu_custom_call.1} parent=31 // pred_check
          %p208 = pneg %p74
        $region38: #{tpu_custom_call.1} parent=31 // pred_check_branch
          %210 = sbr.rel (%p208) target = $region40
        $region39: #{tpu_custom_call.1} parent=31 // pred_region
          %211 = dma.done [#allocation5], 256
        $region40: #{tpu_custom_call.1} parent=31 // pred_fallthru
          _
        // Predicated region
        $region41: #{tpu_custom_call.1} parent=31 // pred_check
          %p212 = pneg %p95
        $region42: #{tpu_custom_call.1} parent=31 // pred_check_branch
          %214 = sbr.rel (%p212) target = $region44
        $region43: #{tpu_custom_call.1} parent=31 // pred_region
          %215 = dma.done [#allocation5], 256
        $region44: #{tpu_custom_call.1} parent=31 // pred_fallthru
          _
        %s216 = sand.u32 %s40, 1
        %s217 = scalar_lea.sflag [#allocation3], %s216
        %s218 = sand.u32 %s40, 1
        %s219 = smul.addr %s218, 64
        %s220 = scalar_lea.vmem [#allocation2], %s219
        %p221 = pneg %p53
        %p222 = pneg %p50
        %p223 = pneg %p74
        %p224 = pneg %p71
        %p225 = pneg %p95
        %p226 = pneg %p92
        %p227 = pneg %p123
        %p228 = pneg %p120
        %s229 = smul.u32 4, %s23
        %p230 = scmp.lt.s32.totalorder %s22, 1
        %s231 = scalar_select %p230, %s22, 1
        %p232 = scmp.lt.s32.totalorder %s229, 3
        %s233 = scalar_select %p232, %s229, 3
        %s234 = smul.addr %s233, 2
        %s235 = smul.addr %s231, 8
        %s236 = sadd.s32 %s234, %s235
        %s237 = smul.addr %s236, 8
        %s238 = scalar_lea.vmem %s3, %s237
        %s239 = smul.u32 4, %s23
        %s240 = smul.u32 4, %s23
        %p241 = scmp.lt.s32.totalorder %s22, 1
        %s242 = scalar_select %p241, %s22, 1
        %p243 = scmp.lt.s32.totalorder %s240, 3
        %s244 = scalar_select %p243, %s240, 3
        %s245 = smul.addr %s244, 2
        %s246 = smul.addr %s242, 8
        %s247 = sadd.s32 %s245, %s246
        %s248 = smul.addr %s247, 8
        %s249 = scalar_lea.vmem %s3, %s248
        %s250 = smul.u32 4, %s23
        %v251 = vld [vmem:[%s203] sm:$0xff]
        %v252 = vld [vmem:[%s203 + $0x8] sm:$0xff]
        %v253 = vld [vmem:[%s203 + $0x10] sm:$0xff]
        %v254 = vld [vmem:[%s203 + $0x18] sm:$0xff]
        %v255 = vld [vmem:[%s203 + $0x20] sm:$0xff]
        %v256 = vld [vmem:[%s203 + $0x28] sm:$0xff]
        %v257 = vld [vmem:[%s203 + $0x30] sm:$0xff]
        %v258 = vld [vmem:[%s203 + $0x38] sm:$0xff]
        %v259 = vld [vmem:[#allocation4] sm:$0xff]
        %v260 = vld [vmem:[#allocation4 + $0x8] sm:$0xf]
        %v261 = vld [vmem:[#allocation6] sm:$0xff]
        %v262 = vld [vmem:[#allocation6 + $0x8] sm:$0xff]
        %vm263 = vcmask 130048
        %v265 = vsel %vm263, %v251, 0
        %v268 = vsel %vm263, %v252, 0
        %v271 = vsel %vm263, %v253, 0
        %v274 = vsel %vm263, %v254, 0
        %v277 = vsel %vm263, %v255, 0
        %v280 = vsel %vm263, %v256, 0
        %v283 = vsel %vm263, %v257, 0
        %v286 = vsel %vm263, %v258, 0
        %288 = vmatprep.subr.mxu0 0.0
        %289 = vmatpush1.msra.mxu0 0.0
        %290 = vmatprep.subr.mxu0 0.0
        %291 = vmatpush1.msra.mxu0 0.0
        %292 = vmatprep.subr.mxu0 0.0
        %293 = vmatpush1.msra.mxu0 0.0
        %294 = vmatprep.subr.mxu0 0.0
        %295 = vmatpush1.msra.mxu0 0.0
        %296 = vmatprep.subr.mxu0 0.0
        %297 = vmatpush1.msra.mxu0 0.0
        %298 = vmatprep.subr.mxu0 0.0
        %299 = vmatpush1.msra.mxu0 0.0
        %300 = vmatprep.subr.mxu0 0.0
        %301 = vmatpush1.msra.mxu0 0.0
        %302 = vmatprep.subr.mxu0 0.0
        %303 = vmatpush1.msra.mxu0 0.0
        %304 = vmatprep.subr.mxu0 0.0
        %305 = vmatpush1.msra.mxu0 0.0
        %306 = vmatprep.subr.mxu0 0.0
        %307 = vmatpush1.msra.mxu0 0.0
        %308 = vmatprep.subr.mxu0 0.0
        %309 = vmatpush1.msra.mxu0 0.0
        %310 = vmatprep.subr.mxu0 0.0
        %311 = vmatpush1.msra.mxu0 0.0
        %312 = vmatprep.subr.mxu0 0.0
        %313 = vmatpush1.msra.mxu0 0.0
        %314 = vmatprep.subr.mxu0 0.0
        %315 = vmatpush1.msra.mxu0 0.0
        %316 = vmatprep.subr.mxu0 0.0
        %v317 = vand.u32 %v262, 4294901760
        %318 = vmatpush1.msra.mxu0 %v317
        %319 = vmatprep.subr.mxu0 0.0
        %v320 = vand.u32 %v261, 4294901760
        %321 = vmatpush1.msra.mxu0 %v320
        %322 = vmatprep.subr.mxu0 0.0
        %323 = vmatpush2.msra.mxu0 0.0
        %324 = vmatprep.subr.mxu0 0.0
        %325 = vmatpush2.msra.mxu0 0.0
        %326 = vmatprep.subr.mxu0 0.0
        %327 = vmatpush2.msra.mxu0 0.0
        %328 = vmatprep.subr.mxu0 0.0
        %329 = vmatpush2.msra.mxu0 0.0
        %330 = vmatprep.subr.mxu0 0.0
        %331 = vmatpush2.msra.mxu0 0.0
        %332 = vmatprep.subr.mxu0 0.0
        %333 = vmatpush2.msra.mxu0 0.0
        %334 = vmatprep.subr.mxu0 0.0
        %335 = vmatpush2.msra.mxu0 0.0
        %336 = vmatprep.subr.mxu0 0.0
        %337 = vmatpush2.msra.mxu0 0.0
        %338 = vmatprep.subr.mxu0 0.0
        %339 = vmatpush2.msra.mxu0 0.0
        %340 = vmatprep.subr.mxu0 0.0
        %341 = vmatpush2.msra.mxu0 0.0
        %342 = vmatprep.subr.mxu0 0.0
        %343 = vmatpush2.msra.mxu0 0.0
        %344 = vmatprep.subr.mxu0 0.0
        %345 = vmatpush2.msra.mxu0 0.0
        %346 = vmatprep.subr.mxu0 0.0
        %347 = vmatpush2.msra.mxu0 0.0
        %348 = vmatprep.subr.mxu0 0.0
        %349 = vmatpush2.msra.mxu0 0.0
        %350 = vmatprep.subr.mxu0 0.0
        %351 = vmatpush2.msra.mxu0 0.0
        %352 = vmatprep.subr.mxu0 0.0
        %353 = vmatpush2.msra.mxu0 0.0
        %354 = vmatprep.mubr.f32.mxu0 0.0
        %v355 = vand.u32 %v265, 4294901760
        %v356 = vsub.f32 %v265, %v355
        %v357 = vand.u32 %v356, 4294901760
        %v358 = vsub.f32 %v356, %v357
        %v359 = vand.u32 %v358, 4294901760
        %360 = vmatmul.mubr.f32.gmra.mxu0 %v359
        %v361 = vpop.f32.mrf.mxu0
        %v362 = vadd.f32 0.0, %v361
        %v363 = vpop.f32.mrf.mxu0
        %364 = vmatprep.mubr.f32.mxu0 0.0
        %v365 = vand.u32 %v268, 4294901760
        %v366 = vsub.f32 %v268, %v365
        %v367 = vand.u32 %v366, 4294901760
        %v368 = vsub.f32 %v366, %v367
        %v369 = vand.u32 %v368, 4294901760
        %370 = vmatmul.mubr.f32.gmra.mxu0 %v369
        %v371 = vpop.f32.mrf.mxu0
        %v372 = vadd.f32 0.0, %v371
        %v373 = vpop.f32.mrf.mxu0
        %374 = vmatprep.mubr.f32.mxu0 0.0
        %v375 = vand.u32 %v271, 4294901760
        %v376 = vsub.f32 %v271, %v375
        %v377 = vand.u32 %v376, 4294901760
        %v378 = vsub.f32 %v376, %v377
        %v379 = vand.u32 %v378, 4294901760
        %380 = vmatmul.mubr.f32.gmra.mxu0 %v379
        %v381 = vpop.f32.mrf.mxu0
        %v382 = vadd.f32 0.0, %v381
        %v383 = vpop.f32.mrf.mxu0
        %384 = vmatprep.mubr.f32.mxu0 0.0
        %v385 = vand.u32 %v274, 4294901760
        %v386 = vsub.f32 %v274, %v385
        %v387 = vand.u32 %v386, 4294901760
        %v388 = vsub.f32 %v386, %v387
        %v389 = vand.u32 %v388, 4294901760
        %390 = vmatmul.mubr.f32.gmra.mxu0 %v389
        %v391 = vpop.f32.mrf.mxu0
        %v392 = vadd.f32 0.0, %v391
        %v393 = vpop.f32.mrf.mxu0
        %394 = vmatprep.mubr.f32.mxu0 0.0
        %v395 = vand.u32 %v277, 4294901760
        %v396 = vsub.f32 %v277, %v395
        %v397 = vand.u32 %v396, 4294901760
        %v398 = vsub.f32 %v396, %v397
        %v399 = vand.u32 %v398, 4294901760
        %400 = vmatmul.mubr.f32.gmra.mxu0 %v399
        %v401 = vpop.f32.mrf.mxu0
        %v402 = vadd.f32 0.0, %v401
        %v403 = vpop.f32.mrf.mxu0
        %404 = vmatprep.mubr.f32.mxu0 0.0
        %v405 = vand.u32 %v280, 4294901760
        %v406 = vsub.f32 %v280, %v405
        %v407 = vand.u32 %v406, 4294901760
        %v408 = vsub.f32 %v406, %v407
        %v409 = vand.u32 %v408, 4294901760
        %410 = vmatmul.mubr.f32.gmra.mxu0 %v409
        %v411 = vpop.f32.mrf.mxu0
        %v412 = vadd.f32 0.0, %v411
        %v413 = vpop.f32.mrf.mxu0
        %414 = vmatprep.mubr.f32.mxu0 0.0
        %v415 = vand.u32 %v283, 4294901760
        %v416 = vsub.f32 %v283, %v415
        %v417 = vand.u32 %v416, 4294901760
        %v418 = vsub.f32 %v416, %v417
        %v419 = vand.u32 %v418, 4294901760
        %420 = vmatmul.mubr.f32.gmra.mxu0 %v419
        %v421 = vpop.f32.mrf.mxu0
        %v422 = vadd.f32 0.0, %v421
        %v423 = vpop.f32.mrf.mxu0
        %424 = vmatprep.mubr.f32.mxu0 0.0
        %v425 = vand.u32 %v286, 4294901760
        %v426 = vsub.f32 %v286, %v425
        %v427 = vand.u32 %v426, 4294901760
        %v428 = vsub.f32 %v426, %v427
        %v429 = vand.u32 %v428, 4294901760
        %430 = vmatmul.mubr.f32.gmra.mxu0 %v429
        %v431 = vpop.f32.mrf.mxu0
        %v432 = vadd.f32 0.0, %v431
        %v433 = vpop.f32.mrf.mxu0
        %434 = vdwg.mxu0
        %435 = vmatprep.subr.mxu0 0.0
        %436 = vmatpush1.msra.mxu0 0.0
        %437 = vmatprep.subr.mxu0 0.0
        %438 = vmatpush1.msra.mxu0 0.0
        %439 = vmatprep.subr.mxu0 0.0
        %440 = vmatpush1.msra.mxu0 0.0
        %441 = vmatprep.subr.mxu0 0.0
        %442 = vmatpush1.msra.mxu0 0.0
        %443 = vmatprep.subr.mxu0 0.0
        %444 = vmatpush1.msra.mxu0 0.0
        %445 = vmatprep.subr.mxu0 0.0
        %446 = vmatpush1.msra.mxu0 0.0
        %447 = vmatprep.subr.mxu0 0.0
        %448 = vmatpush1.msra.mxu0 0.0
        %449 = vmatprep.subr.mxu0 0.0
        %450 = vmatpush1.msra.mxu0 0.0
        %451 = vmatprep.subr.mxu0 0.0
        %452 = vmatpush1.msra.mxu0 0.0
        %453 = vmatprep.subr.mxu0 0.0
        %454 = vmatpush1.msra.mxu0 0.0
        %455 = vmatprep.subr.mxu0 0.0
        %456 = vmatpush1.msra.mxu0 0.0
        %457 = vmatprep.subr.mxu0 0.0
        %458 = vmatpush1.msra.mxu0 0.0
        %459 = vmatprep.subr.mxu0 0.0
        %460 = vmatpush1.msra.mxu0 0.0
        %461 = vmatprep.subr.mxu0 0.0
        %462 = vmatpush1.msra.mxu0 0.0
        %463 = vmatprep.subr.mxu0 0.0
        %v464 = vand.u32 %v262, 4294901760
        %v465 = vsub.f32 %v262, %v464
        %v466 = vand.u32 %v465, 4294901760
        %v467 = vsub.f32 %v465, %v466
        %v468 = vand.u32 %v467, 4294901760
        %469 = vmatpush1.msra.mxu0 %v468
        %470 = vmatprep.subr.mxu0 0.0
        %v471 = vand.u32 %v261, 4294901760
        %v472 = vsub.f32 %v261, %v471
        %v473 = vand.u32 %v472, 4294901760
        %v474 = vsub.f32 %v472, %v473
        %v475 = vand.u32 %v474, 4294901760
        %476 = vmatpush1.msra.mxu0 %v475
        %477 = vmatprep.subr.mxu0 0.0
        %478 = vmatpush2.msra.mxu0 0.0
        %479 = vmatprep.subr.mxu0 0.0
        %480 = vmatpush2.msra.mxu0 0.0
        %481 = vmatprep.subr.mxu0 0.0
        %482 = vmatpush2.msra.mxu0 0.0
        %483 = vmatprep.subr.mxu0 0.0
        %484 = vmatpush2.msra.mxu0 0.0
        %485 = vmatprep.subr.mxu0 0.0
        %486 = vmatpush2.msra.mxu0 0.0
        %487 = vmatprep.subr.mxu0 0.0
        %488 = vmatpush2.msra.mxu0 0.0
        %489 = vmatprep.subr.mxu0 0.0
        %490 = vmatpush2.msra.mxu0 0.0
        %491 = vmatprep.subr.mxu0 0.0
        %492 = vmatpush2.msra.mxu0 0.0
        %493 = vmatprep.subr.mxu0 0.0
        %494 = vmatpush2.msra.mxu0 0.0
        %495 = vmatprep.subr.mxu0 0.0
        %496 = vmatpush2.msra.mxu0 0.0
        %497 = vmatprep.subr.mxu0 0.0
        %498 = vmatpush2.msra.mxu0 0.0
        %499 = vmatprep.subr.mxu0 0.0
        %500 = vmatpush2.msra.mxu0 0.0
        %501 = vmatprep.subr.mxu0 0.0
        %502 = vmatpush2.msra.mxu0 0.0
        %503 = vmatprep.subr.mxu0 0.0
        %504 = vmatpush2.msra.mxu0 0.0
        %505 = vmatprep.subr.mxu0 0.0
        %506 = vmatpush2.msra.mxu0 0.0
        %507 = vmatprep.subr.mxu0 0.0
        %508 = vmatpush2.msra.mxu0 0.0
        %509 = vmatprep.mubr.f32.mxu0 0.0
        %v510 = vand.u32 %v265, 4294901760
        %511 = vmatmul.mubr.f32.gmra.mxu0 %v510
        %v512 = vpop.f32.mrf.mxu0
        %v513 = vadd.f32 %v362, %v512
        %v514 = vpop.f32.mrf.mxu0
        %515 = vmatprep.mubr.f32.mxu0 0.0
        %v516 = vand.u32 %v268, 4294901760
        %517 = vmatmul.mubr.f32.gmra.mxu0 %v516
        %v518 = vpop.f32.mrf.mxu0
        %v519 = vadd.f32 %v372, %v518
        %v520 = vpop.f32.mrf.mxu0
        %521 = vmatprep.mubr.f32.mxu0 0.0
        %v522 = vand.u32 %v271, 4294901760
        %523 = vmatmul.mubr.f32.gmra.mxu0 %v522
        %v524 = vpop.f32.mrf.mxu0
        %v525 = vadd.f32 %v382, %v524
        %v526 = vpop.f32.mrf.mxu0
        %527 = vmatprep.mubr.f32.mxu0 0.0
        %v528 = vand.u32 %v274, 4294901760
        %529 = vmatmul.mubr.f32.gmra.mxu0 %v528
        %v530 = vpop.f32.mrf.mxu0
        %v531 = vadd.f32 %v392, %v530
        %v532 = vpop.f32.mrf.mxu0
        %533 = vmatprep.mubr.f32.mxu0 0.0
        %v534 = vand.u32 %v277, 4294901760
        %535 = vmatmul.mubr.f32.gmra.mxu0 %v534
        %v536 = vpop.f32.mrf.mxu0
        %v537 = vadd.f32 %v402, %v536
        %v538 = vpop.f32.mrf.mxu0
        %539 = vmatprep.mubr.f32.mxu0 0.0
        %v540 = vand.u32 %v280, 4294901760
        %541 = vmatmul.mubr.f32.gmra.mxu0 %v540
        %v542 = vpop.f32.mrf.mxu0
        %v543 = vadd.f32 %v412, %v542
        %v544 = vpop.f32.mrf.mxu0
        %545 = vmatprep.mubr.f32.mxu0 0.0
        %v546 = vand.u32 %v283, 4294901760
        %547 = vmatmul.mubr.f32.gmra.mxu0 %v546
        %v548 = vpop.f32.mrf.mxu0
        %v549 = vadd.f32 %v422, %v548
        %v550 = vpop.f32.mrf.mxu0
        %551 = vmatprep.mubr.f32.mxu0 0.0
        %v552 = vand.u32 %v286, 4294901760
        %553 = vmatmul.mubr.f32.gmra.mxu0 %v552
        %v554 = vpop.f32.mrf.mxu0
        %v555 = vadd.f32 %v432, %v554
        %v556 = vpop.f32.mrf.mxu0
        %557 = vdwg.mxu0
        %558 = vmatprep.subr.mxu0 0.0
        %559 = vmatpush1.msra.mxu0 0.0
        %560 = vmatprep.subr.mxu0 0.0
        %561 = vmatpush1.msra.mxu0 0.0
        %562 = vmatprep.subr.mxu0 0.0
        %563 = vmatpush1.msra.mxu0 0.0
        %564 = vmatprep.subr.mxu0 0.0
        %565 = vmatpush1.msra.mxu0 0.0
        %566 = vmatprep.subr.mxu0 0.0
        %567 = vmatpush1.msra.mxu0 0.0
        %568 = vmatprep.subr.mxu0 0.0
        %569 = vmatpush1.msra.mxu0 0.0
        %570 = vmatprep.subr.mxu0 0.0
        %571 = vmatpush1.msra.mxu0 0.0
        %572 = vmatprep.subr.mxu0 0.0
        %573 = vmatpush1.msra.mxu0 0.0
        %574 = vmatprep.subr.mxu0 0.0
        %575 = vmatpush1.msra.mxu0 0.0
        %576 = vmatprep.subr.mxu0 0.0
        %577 = vmatpush1.msra.mxu0 0.0
        %578 = vmatprep.subr.mxu0 0.0
        %579 = vmatpush1.msra.mxu0 0.0
        %580 = vmatprep.subr.mxu0 0.0
        %581 = vmatpush1.msra.mxu0 0.0
        %582 = vmatprep.subr.mxu0 0.0
        %583 = vmatpush1.msra.mxu0 0.0
        %584 = vmatprep.subr.mxu0 0.0
        %585 = vmatpush1.msra.mxu0 0.0
        %586 = vmatprep.subr.mxu0 0.0
        %v587 = vand.u32 %v262, 4294901760
        %v588 = vsub.f32 %v262, %v587
        %589 = vmatpush1.msra.mxu0 %v588
        %590 = vmatprep.subr.mxu0 0.0
        %v591 = vand.u32 %v261, 4294901760
        %v592 = vsub.f32 %v261, %v591
        %593 = vmatpush1.msra.mxu0 %v592
        %594 = vmatprep.subr.mxu0 0.0
        %595 = vmatpush2.msra.mxu0 0.0
        %596 = vmatprep.subr.mxu0 0.0
        %597 = vmatpush2.msra.mxu0 0.0
        %598 = vmatprep.subr.mxu0 0.0
        %599 = vmatpush2.msra.mxu0 0.0
        %600 = vmatprep.subr.mxu0 0.0
        %601 = vmatpush2.msra.mxu0 0.0
        %602 = vmatprep.subr.mxu0 0.0
        %603 = vmatpush2.msra.mxu0 0.0
        %604 = vmatprep.subr.mxu0 0.0
        %605 = vmatpush2.msra.mxu0 0.0
        %606 = vmatprep.subr.mxu0 0.0
        %607 = vmatpush2.msra.mxu0 0.0
        %608 = vmatprep.subr.mxu0 0.0
        %609 = vmatpush2.msra.mxu0 0.0
        %610 = vmatprep.subr.mxu0 0.0
        %611 = vmatpush2.msra.mxu0 0.0
        %612 = vmatprep.subr.mxu0 0.0
        %613 = vmatpush2.msra.mxu0 0.0
        %614 = vmatprep.subr.mxu0 0.0
        %615 = vmatpush2.msra.mxu0 0.0
        %616 = vmatprep.subr.mxu0 0.0
        %617 = vmatpush2.msra.mxu0 0.0
        %618 = vmatprep.subr.mxu0 0.0
        %619 = vmatpush2.msra.mxu0 0.0
        %620 = vmatprep.subr.mxu0 0.0
        %621 = vmatpush2.msra.mxu0 0.0
        %622 = vmatprep.subr.mxu0 0.0
        %623 = vmatpush2.msra.mxu0 0.0
        %624 = vmatprep.subr.mxu0 0.0
        %625 = vmatpush2.msra.mxu0 0.0
        %626 = vmatprep.mubr.f32.mxu0 0.0
        %v627 = vand.u32 %v265, 4294901760
        %v628 = vsub.f32 %v265, %v627
        %629 = vmatmul.mubr.f32.gmra.mxu0 %v628
        %v630 = vpop.f32.mrf.mxu0
        %v631 = vadd.f32 %v513, %v630
        %v632 = vpop.f32.mrf.mxu0
        %633 = vmatprep.mubr.f32.mxu0 0.0
        %v634 = vand.u32 %v268, 4294901760
        %v635 = vsub.f32 %v268, %v634
        %636 = vmatmul.mubr.f32.gmra.mxu0 %v635
        %v637 = vpop.f32.mrf.mxu0
        %v638 = vadd.f32 %v519, %v637
        %v639 = vpop.f32.mrf.mxu0
        %640 = vmatprep.mubr.f32.mxu0 0.0
        %v641 = vand.u32 %v271, 4294901760
        %v642 = vsub.f32 %v271, %v641
        %643 = vmatmul.mubr.f32.gmra.mxu0 %v642
        %v644 = vpop.f32.mrf.mxu0
        %v645 = vadd.f32 %v525, %v644
        %v646 = vpop.f32.mrf.mxu0
        %647 = vmatprep.mubr.f32.mxu0 0.0
        %v648 = vand.u32 %v274, 4294901760
        %v649 = vsub.f32 %v274, %v648
        %650 = vmatmul.mubr.f32.gmra.mxu0 %v649
        %v651 = vpop.f32.mrf.mxu0
        %v652 = vadd.f32 %v531, %v651
        %v653 = vpop.f32.mrf.mxu0
        %654 = vmatprep.mubr.f32.mxu0 0.0
        %v655 = vand.u32 %v277, 4294901760
        %v656 = vsub.f32 %v277, %v655
        %657 = vmatmul.mubr.f32.gmra.mxu0 %v656
        %v658 = vpop.f32.mrf.mxu0
        %v659 = vadd.f32 %v537, %v658
        %v660 = vpop.f32.mrf.mxu0
        %661 = vmatprep.mubr.f32.mxu0 0.0
        %v662 = vand.u32 %v280, 4294901760
        %v663 = vsub.f32 %v280, %v662
        %664 = vmatmul.mubr.f32.gmra.mxu0 %v663
        %v665 = vpop.f32.mrf.mxu0
        %v666 = vadd.f32 %v543, %v665
        %v667 = vpop.f32.mrf.mxu0
        %668 = vmatprep.mubr.f32.mxu0 0.0
        %v669 = vand.u32 %v283, 4294901760
        %v670 = vsub.f32 %v283, %v669
        %671 = vmatmul.mubr.f32.gmra.mxu0 %v670
        %v672 = vpop.f32.mrf.mxu0
        %v673 = vadd.f32 %v549, %v672
        %v674 = vpop.f32.mrf.mxu0
        %675 = vmatprep.mubr.f32.mxu0 0.0
        %v676 = vand.u32 %v286, 4294901760
        %v677 = vsub.f32 %v286, %v676
        %678 = vmatmul.mubr.f32.gmra.mxu0 %v677
        %v679 = vpop.f32.mrf.mxu0
        %v680 = vadd.f32 %v555, %v679
        %v681 = vpop.f32.mrf.mxu0
        %682 = vdwg.mxu0
        %683 = vmatprep.subr.mxu0 0.0
        %684 = vmatpush1.msra.mxu0 0.0
        %685 = vmatprep.subr.mxu0 0.0
        %686 = vmatpush1.msra.mxu0 0.0
        %687 = vmatprep.subr.mxu0 0.0
        %688 = vmatpush1.msra.mxu0 0.0
        %689 = vmatprep.subr.mxu0 0.0
        %690 = vmatpush1.msra.mxu0 0.0
        %691 = vmatprep.subr.mxu0 0.0
        %692 = vmatpush1.msra.mxu0 0.0
        %693 = vmatprep.subr.mxu0 0.0
        %694 = vmatpush1.msra.mxu0 0.0
        %695 = vmatprep.subr.mxu0 0.0
        %696 = vmatpush1.msra.mxu0 0.0
        %697 = vmatprep.subr.mxu0 0.0
        %698 = vmatpush1.msra.mxu0 0.0
        %699 = vmatprep.subr.mxu0 0.0
        %700 = vmatpush1.msra.mxu0 0.0
        %701 = vmatprep.subr.mxu0 0.0
        %702 = vmatpush1.msra.mxu0 0.0
        %703 = vmatprep.subr.mxu0 0.0
        %704 = vmatpush1.msra.mxu0 0.0
        %705 = vmatprep.subr.mxu0 0.0
        %706 = vmatpush1.msra.mxu0 0.0
        %707 = vmatprep.subr.mxu0 0.0
        %708 = vmatpush1.msra.mxu0 0.0
        %709 = vmatprep.subr.mxu0 0.0
        %710 = vmatpush1.msra.mxu0 0.0
        %711 = vmatprep.subr.mxu0 0.0
        %v712 = vand.u32 %v262, 4294901760
        %713 = vmatpush1.msra.mxu0 %v712
        %714 = vmatprep.subr.mxu0 0.0
        %v715 = vand.u32 %v261, 4294901760
        %716 = vmatpush1.msra.mxu0 %v715
        %717 = vmatprep.subr.mxu0 0.0
        %718 = vmatpush2.msra.mxu0 0.0
        %719 = vmatprep.subr.mxu0 0.0
        %720 = vmatpush2.msra.mxu0 0.0
        %721 = vmatprep.subr.mxu0 0.0
        %722 = vmatpush2.msra.mxu0 0.0
        %723 = vmatprep.subr.mxu0 0.0
        %724 = vmatpush2.msra.mxu0 0.0
        %725 = vmatprep.subr.mxu0 0.0
        %726 = vmatpush2.msra.mxu0 0.0
        %727 = vmatprep.subr.mxu0 0.0
        %728 = vmatpush2.msra.mxu0 0.0
        %729 = vmatprep.subr.mxu0 0.0
        %730 = vmatpush2.msra.mxu0 0.0
        %731 = vmatprep.subr.mxu0 0.0
        %732 = vmatpush2.msra.mxu0 0.0
        %733 = vmatprep.subr.mxu0 0.0
        %734 = vmatpush2.msra.mxu0 0.0
        %735 = vmatprep.subr.mxu0 0.0
        %736 = vmatpush2.msra.mxu0 0.0
        %737 = vmatprep.subr.mxu0 0.0
        %738 = vmatpush2.msra.mxu0 0.0
        %739 = vmatprep.subr.mxu0 0.0
        %740 = vmatpush2.msra.mxu0 0.0
        %741 = vmatprep.subr.mxu0 0.0
        %742 = vmatpush2.msra.mxu0 0.0
        %743 = vmatprep.subr.mxu0 0.0
        %744 = vmatpush2.msra.mxu0 0.0
        %745 = vmatprep.subr.mxu0 0.0
        %746 = vmatpush2.msra.mxu0 0.0
        %747 = vmatprep.subr.mxu0 0.0
        %748 = vmatpush2.msra.mxu0 0.0
        %749 = vmatprep.mubr.f32.mxu0 0.0
        %v750 = vand.u32 %v265, 4294901760
        %v751 = vsub.f32 %v265, %v750
        %v752 = vand.u32 %v751, 4294901760
        %753 = vmatmul.mubr.f32.gmra.mxu0 %v752
        %v754 = vpop.f32.mrf.mxu0
        %v755 = vadd.f32 %v631, %v754
        %v756 = vpop.f32.mrf.mxu0
        %757 = vmatprep.mubr.f32.mxu0 0.0
        %v758 = vand.u32 %v268, 4294901760
        %v759 = vsub.f32 %v268, %v758
        %v760 = vand.u32 %v759, 4294901760
        %761 = vmatmul.mubr.f32.gmra.mxu0 %v760
        %v762 = vpop.f32.mrf.mxu0
        %v763 = vadd.f32 %v638, %v762
        %v764 = vpop.f32.mrf.mxu0
        %765 = vmatprep.mubr.f32.mxu0 0.0
        %v766 = vand.u32 %v271, 4294901760
        %v767 = vsub.f32 %v271, %v766
        %v768 = vand.u32 %v767, 4294901760
        %769 = vmatmul.mubr.f32.gmra.mxu0 %v768
        %v770 = vpop.f32.mrf.mxu0
        %v771 = vadd.f32 %v645, %v770
        %v772 = vpop.f32.mrf.mxu0
        %773 = vmatprep.mubr.f32.mxu0 0.0
        %v774 = vand.u32 %v274, 4294901760
        %v775 = vsub.f32 %v274, %v774
        %v776 = vand.u32 %v775, 4294901760
        %777 = vmatmul.mubr.f32.gmra.mxu0 %v776
        %v778 = vpop.f32.mrf.mxu0
        %v779 = vadd.f32 %v652, %v778
        %v780 = vpop.f32.mrf.mxu0
        %781 = vmatprep.mubr.f32.mxu0 0.0
        %v782 = vand.u32 %v277, 4294901760
        %v783 = vsub.f32 %v277, %v782
        %v784 = vand.u32 %v783, 4294901760
        %785 = vmatmul.mubr.f32.gmra.mxu0 %v784
        %v786 = vpop.f32.mrf.mxu0
        %v787 = vadd.f32 %v659, %v786
        %v788 = vpop.f32.mrf.mxu0
        %789 = vmatprep.mubr.f32.mxu0 0.0
        %v790 = vand.u32 %v280, 4294901760
        %v791 = vsub.f32 %v280, %v790
        %v792 = vand.u32 %v791, 4294901760
        %793 = vmatmul.mubr.f32.gmra.mxu0 %v792
        %v794 = vpop.f32.mrf.mxu0
        %v795 = vadd.f32 %v666, %v794
        %v796 = vpop.f32.mrf.mxu0
        %797 = vmatprep.mubr.f32.mxu0 0.0
        %v798 = vand.u32 %v283, 4294901760
        %v799 = vsub.f32 %v283, %v798
        %v800 = vand.u32 %v799, 4294901760
        %801 = vmatmul.mubr.f32.gmra.mxu0 %v800
        %v802 = vpop.f32.mrf.mxu0
        %v803 = vadd.f32 %v673, %v802
        %v804 = vpop.f32.mrf.mxu0
        %805 = vmatprep.mubr.f32.mxu0 0.0
        %v806 = vand.u32 %v286, 4294901760
        %v807 = vsub.f32 %v286, %v806
        %v808 = vand.u32 %v807, 4294901760
        %809 = vmatmul.mubr.f32.gmra.mxu0 %v808
        %v810 = vpop.f32.mrf.mxu0
        %v811 = vadd.f32 %v680, %v810
        %v812 = vpop.f32.mrf.mxu0
        %813 = vdwg.mxu0
        %814 = vmatprep.subr.mxu0 0.0
        %815 = vmatpush1.msra.mxu0 0.0
        %816 = vmatprep.subr.mxu0 0.0
        %817 = vmatpush1.msra.mxu0 0.0
        %818 = vmatprep.subr.mxu0 0.0
        %819 = vmatpush1.msra.mxu0 0.0
        %820 = vmatprep.subr.mxu0 0.0
        %821 = vmatpush1.msra.mxu0 0.0
        %822 = vmatprep.subr.mxu0 0.0
        %823 = vmatpush1.msra.mxu0 0.0
        %824 = vmatprep.subr.mxu0 0.0
        %825 = vmatpush1.msra.mxu0 0.0
        %826 = vmatprep.subr.mxu0 0.0
        %827 = vmatpush1.msra.mxu0 0.0
        %828 = vmatprep.subr.mxu0 0.0
        %829 = vmatpush1.msra.mxu0 0.0
        %830 = vmatprep.subr.mxu0 0.0
        %831 = vmatpush1.msra.mxu0 0.0
        %832 = vmatprep.subr.mxu0 0.0
        %833 = vmatpush1.msra.mxu0 0.0
        %834 = vmatprep.subr.mxu0 0.0
        %835 = vmatpush1.msra.mxu0 0.0
        %836 = vmatprep.subr.mxu0 0.0
        %837 = vmatpush1.msra.mxu0 0.0
        %838 = vmatprep.subr.mxu0 0.0
        %839 = vmatpush1.msra.mxu0 0.0
        %840 = vmatprep.subr.mxu0 0.0
        %841 = vmatpush1.msra.mxu0 0.0
        %842 = vmatprep.subr.mxu0 0.0
        %v843 = vand.u32 %v262, 4294901760
        %v844 = vsub.f32 %v262, %v843
        %v845 = vand.u32 %v844, 4294901760
        %846 = vmatpush1.msra.mxu0 %v845
        %847 = vmatprep.subr.mxu0 0.0
        %v848 = vand.u32 %v261, 4294901760
        %v849 = vsub.f32 %v261, %v848
        %v850 = vand.u32 %v849, 4294901760
        %851 = vmatpush1.msra.mxu0 %v850
        %852 = vmatprep.subr.mxu0 0.0
        %853 = vmatpush2.msra.mxu0 0.0
        %854 = vmatprep.subr.mxu0 0.0
        %855 = vmatpush2.msra.mxu0 0.0
        %856 = vmatprep.subr.mxu0 0.0
        %857 = vmatpush2.msra.mxu0 0.0
        %858 = vmatprep.subr.mxu0 0.0
        %859 = vmatpush2.msra.mxu0 0.0
        %860 = vmatprep.subr.mxu0 0.0
        %861 = vmatpush2.msra.mxu0 0.0
        %862 = vmatprep.subr.mxu0 0.0
        %863 = vmatpush2.msra.mxu0 0.0
        %864 = vmatprep.subr.mxu0 0.0
        %865 = vmatpush2.msra.mxu0 0.0
        %866 = vmatprep.subr.mxu0 0.0
        %867 = vmatpush2.msra.mxu0 0.0
        %868 = vmatprep.subr.mxu0 0.0
        %869 = vmatpush2.msra.mxu0 0.0
        %870 = vmatprep.subr.mxu0 0.0
        %871 = vmatpush2.msra.mxu0 0.0
        %872 = vmatprep.subr.mxu0 0.0
        %873 = vmatpush2.msra.mxu0 0.0
        %874 = vmatprep.subr.mxu0 0.0
        %875 = vmatpush2.msra.mxu0 0.0
        %876 = vmatprep.subr.mxu0 0.0
        %877 = vmatpush2.msra.mxu0 0.0
        %878 = vmatprep.subr.mxu0 0.0
        %879 = vmatpush2.msra.mxu0 0.0
        %880 = vmatprep.subr.mxu0 0.0
        %881 = vmatpush2.msra.mxu0 0.0
        %882 = vmatprep.subr.mxu0 0.0
        %883 = vmatpush2.msra.mxu0 0.0
        %884 = vmatprep.mubr.f32.mxu0 0.0
        %v885 = vand.u32 %v265, 4294901760
        %886 = vmatmul.mubr.f32.gmra.mxu0 %v885
        %v887 = vpop.f32.mrf.mxu0
        %v888 = vadd.f32 %v755, %v887
        %v889 = vpop.f32.mrf.mxu0
        %890 = vmatprep.mubr.f32.mxu0 0.0
        %v891 = vand.u32 %v268, 4294901760
        %892 = vmatmul.mubr.f32.gmra.mxu0 %v891
        %v893 = vpop.f32.mrf.mxu0
        %v894 = vadd.f32 %v763, %v893
        %v895 = vpop.f32.mrf.mxu0
        %896 = vmatprep.mubr.f32.mxu0 0.0
        %v897 = vand.u32 %v271, 4294901760
        %898 = vmatmul.mubr.f32.gmra.mxu0 %v897
        %v899 = vpop.f32.mrf.mxu0
        %v900 = vadd.f32 %v771, %v899
        %v901 = vpop.f32.mrf.mxu0
        %902 = vmatprep.mubr.f32.mxu0 0.0
        %v903 = vand.u32 %v274, 4294901760
        %904 = vmatmul.mubr.f32.gmra.mxu0 %v903
        %v905 = vpop.f32.mrf.mxu0
        %v906 = vadd.f32 %v779, %v905
        %v907 = vpop.f32.mrf.mxu0
        %908 = vmatprep.mubr.f32.mxu0 0.0
        %v909 = vand.u32 %v277, 4294901760
        %910 = vmatmul.mubr.f32.gmra.mxu0 %v909
        %v911 = vpop.f32.mrf.mxu0
        %v912 = vadd.f32 %v787, %v911
        %v913 = vpop.f32.mrf.mxu0
        %914 = vmatprep.mubr.f32.mxu0 0.0
        %v915 = vand.u32 %v280, 4294901760
        %916 = vmatmul.mubr.f32.gmra.mxu0 %v915
        %v917 = vpop.f32.mrf.mxu0
        %v918 = vadd.f32 %v795, %v917
        %v919 = vpop.f32.mrf.mxu0
        %920 = vmatprep.mubr.f32.mxu0 0.0
        %v921 = vand.u32 %v283, 4294901760
        %922 = vmatmul.mubr.f32.gmra.mxu0 %v921
        %v923 = vpop.f32.mrf.mxu0
        %v924 = vadd.f32 %v803, %v923
        %v925 = vpop.f32.mrf.mxu0
        %926 = vmatprep.mubr.f32.mxu0 0.0
        %v927 = vand.u32 %v286, 4294901760
        %928 = vmatmul.mubr.f32.gmra.mxu0 %v927
        %v929 = vpop.f32.mrf.mxu0
        %v930 = vadd.f32 %v811, %v929
        %v931 = vpop.f32.mrf.mxu0
        %932 = vdwg.mxu0
        %933 = vmatprep.subr.mxu0 0.0
        %934 = vmatpush1.msra.mxu0 0.0
        %935 = vmatprep.subr.mxu0 0.0
        %936 = vmatpush1.msra.mxu0 0.0
        %937 = vmatprep.subr.mxu0 0.0
        %938 = vmatpush1.msra.mxu0 0.0
        %939 = vmatprep.subr.mxu0 0.0
        %940 = vmatpush1.msra.mxu0 0.0
        %941 = vmatprep.subr.mxu0 0.0
        %942 = vmatpush1.msra.mxu0 0.0
        %943 = vmatprep.subr.mxu0 0.0
        %944 = vmatpush1.msra.mxu0 0.0
        %945 = vmatprep.subr.mxu0 0.0
        %946 = vmatpush1.msra.mxu0 0.0
        %947 = vmatprep.subr.mxu0 0.0
        %948 = vmatpush1.msra.mxu0 0.0
        %949 = vmatprep.subr.mxu0 0.0
        %950 = vmatpush1.msra.mxu0 0.0
        %951 = vmatprep.subr.mxu0 0.0
        %952 = vmatpush1.msra.mxu0 0.0
        %953 = vmatprep.subr.mxu0 0.0
        %954 = vmatpush1.msra.mxu0 0.0
        %955 = vmatprep.subr.mxu0 0.0
        %956 = vmatpush1.msra.mxu0 0.0
        %957 = vmatprep.subr.mxu0 0.0
        %958 = vmatpush1.msra.mxu0 0.0
        %959 = vmatprep.subr.mxu0 0.0
        %960 = vmatpush1.msra.mxu0 0.0
        %961 = vmatprep.subr.mxu0 0.0
        %v962 = vand.u32 %v262, 4294901760
        %963 = vmatpush1.msra.mxu0 %v962
        %964 = vmatprep.subr.mxu0 0.0
        %v965 = vand.u32 %v261, 4294901760
        %966 = vmatpush1.msra.mxu0 %v965
        %967 = vmatprep.subr.mxu0 0.0
        %968 = vmatpush2.msra.mxu0 0.0
        %969 = vmatprep.subr.mxu0 0.0
        %970 = vmatpush2.msra.mxu0 0.0
        %971 = vmatprep.subr.mxu0 0.0
        %972 = vmatpush2.msra.mxu0 0.0
        %973 = vmatprep.subr.mxu0 0.0
        %974 = vmatpush2.msra.mxu0 0.0
        %975 = vmatprep.subr.mxu0 0.0
        %976 = vmatpush2.msra.mxu0 0.0
        %977 = vmatprep.subr.mxu0 0.0
        %978 = vmatpush2.msra.mxu0 0.0
        %979 = vmatprep.subr.mxu0 0.0
        %980 = vmatpush2.msra.mxu0 0.0
        %981 = vmatprep.subr.mxu0 0.0
        %982 = vmatpush2.msra.mxu0 0.0
        %983 = vmatprep.subr.mxu0 0.0
        %984 = vmatpush2.msra.mxu0 0.0
        %985 = vmatprep.subr.mxu0 0.0
        %986 = vmatpush2.msra.mxu0 0.0
        %987 = vmatprep.subr.mxu0 0.0
        %988 = vmatpush2.msra.mxu0 0.0
        %989 = vmatprep.subr.mxu0 0.0
        %990 = vmatpush2.msra.mxu0 0.0
        %991 = vmatprep.subr.mxu0 0.0
        %992 = vmatpush2.msra.mxu0 0.0
        %993 = vmatprep.subr.mxu0 0.0
        %994 = vmatpush2.msra.mxu0 0.0
        %995 = vmatprep.subr.mxu0 0.0
        %996 = vmatpush2.msra.mxu0 0.0
        %997 = vmatprep.subr.mxu0 0.0
        %998 = vmatpush2.msra.mxu0 0.0
        %999 = vmatprep.mubr.f32.mxu0 0.0
        %v1000 = vand.u32 %v265, 4294901760
        %1001 = vmatmul.mubr.f32.gmra.mxu0 %v1000
        %v1002 = vpop.f32.mrf.mxu0
        %v1003 = vadd.f32 %v888, %v1002
        %v1004 = vpop.f32.mrf.mxu0
        %1005 = vmatprep.mubr.f32.mxu0 0.0
        %v1006 = vand.u32 %v268, 4294901760
        %1007 = vmatmul.mubr.f32.gmra.mxu0 %v1006
        %v1008 = vpop.f32.mrf.mxu0
        %v1009 = vadd.f32 %v894, %v1008
        %v1010 = vpop.f32.mrf.mxu0
        %1011 = vmatprep.mubr.f32.mxu0 0.0
        %v1012 = vand.u32 %v271, 4294901760
        %1013 = vmatmul.mubr.f32.gmra.mxu0 %v1012
        %v1014 = vpop.f32.mrf.mxu0
        %v1015 = vadd.f32 %v900, %v1014
        %v1016 = vpop.f32.mrf.mxu0
        %1017 = vmatprep.mubr.f32.mxu0 0.0
        %v1018 = vand.u32 %v274, 4294901760
        %1019 = vmatmul.mubr.f32.gmra.mxu0 %v1018
        %v1020 = vpop.f32.mrf.mxu0
        %v1021 = vadd.f32 %v906, %v1020
        %v1022 = vpop.f32.mrf.mxu0
        %1023 = vmatprep.mubr.f32.mxu0 0.0
        %v1024 = vand.u32 %v277, 4294901760
        %1025 = vmatmul.mubr.f32.gmra.mxu0 %v1024
        %v1026 = vpop.f32.mrf.mxu0
        %v1027 = vadd.f32 %v912, %v1026
        %v1028 = vpop.f32.mrf.mxu0
        %1029 = vmatprep.mubr.f32.mxu0 0.0
        %v1030 = vand.u32 %v280, 4294901760
        %1031 = vmatmul.mubr.f32.gmra.mxu0 %v1030
        %v1032 = vpop.f32.mrf.mxu0
        %v1033 = vadd.f32 %v918, %v1032
        %v1034 = vpop.f32.mrf.mxu0
        %1035 = vmatprep.mubr.f32.mxu0 0.0
        %v1036 = vand.u32 %v283, 4294901760
        %1037 = vmatmul.mubr.f32.gmra.mxu0 %v1036
        %v1038 = vpop.f32.mrf.mxu0
        %v1039 = vadd.f32 %v924, %v1038
        %v1040 = vpop.f32.mrf.mxu0
        %1041 = vmatprep.mubr.f32.mxu0 0.0
        %v1042 = vand.u32 %v286, 4294901760
        %1043 = vmatmul.mubr.f32.gmra.mxu0 %v1042
        %v1044 = vpop.f32.mrf.mxu0
        %v1045 = vadd.f32 %v930, %v1044
        %v1046 = vpop.f32.mrf.mxu0
        %1047 = vdwg.mxu0
        %v1049 = vsel %vm263, %v259, 0
        %v1052 = vsel %vm263, %v260, 0
        %1054 = vmatprep.subr.mxu0 0.0
        %1055 = vmatpush1.msra.mxu0 0.0
        %1056 = vmatprep.subr.mxu0 0.0
        %1057 = vmatpush1.msra.mxu0 0.0
        %1058 = vmatprep.subr.mxu0 0.0
        %1059 = vmatpush1.msra.mxu0 0.0
        %1060 = vmatprep.subr.mxu0 0.0
        %1061 = vmatpush1.msra.mxu0 0.0
        %1062 = vmatprep.subr.mxu0 0.0
        %1063 = vmatpush1.msra.mxu0 0.0
        %1064 = vmatprep.subr.mxu0 0.0
        %1065 = vmatpush1.msra.mxu0 0.0
        %1066 = vmatprep.subr.mxu0 0.0
        %1067 = vmatpush1.msra.mxu0 0.0
        %1068 = vmatprep.subr.mxu0 0.0
        %1069 = vmatpush1.msra.mxu0 0.0
        %1070 = vmatprep.subr.mxu0 0.0
        %1071 = vmatpush1.msra.mxu0 0.0
        %1072 = vmatprep.subr.mxu0 0.0
        %1073 = vmatpush1.msra.mxu0 0.0
        %1074 = vmatprep.subr.mxu0 0.0
        %1075 = vmatpush1.msra.mxu0 0.0
        %1076 = vmatprep.subr.mxu0 0.0
        %1077 = vmatpush1.msra.mxu0 0.0
        %1078 = vmatprep.subr.mxu0 0.0
        %1079 = vmatpush1.msra.mxu0 0.0
        %1080 = vmatprep.subr.mxu0 0.0
        %1081 = vmatpush1.msra.mxu0 0.0
        %1082 = vmatprep.subr.mxu0 0.0
        %v1083 = vand.u32 %v1009, 4294901760
        %1084 = vmatpush1.msra.mxu0 %v1083
        %1085 = vmatprep.subr.mxu0 0.0
        %v1086 = vand.u32 %v1003, 4294901760
        %1087 = vmatpush1.msra.mxu0 %v1086
        %1088 = vmatprep.subr.mxu0 0.0
        %1089 = vmatpush2.msra.mxu0 0.0
        %1090 = vmatprep.subr.mxu0 0.0
        %1091 = vmatpush2.msra.mxu0 0.0
        %1092 = vmatprep.subr.mxu0 0.0
        %1093 = vmatpush2.msra.mxu0 0.0
        %1094 = vmatprep.subr.mxu0 0.0
        %1095 = vmatpush2.msra.mxu0 0.0
        %1096 = vmatprep.subr.mxu0 0.0
        %1097 = vmatpush2.msra.mxu0 0.0
        %1098 = vmatprep.subr.mxu0 0.0
        %1099 = vmatpush2.msra.mxu0 0.0
        %1100 = vmatprep.subr.mxu0 0.0
        %1101 = vmatpush2.msra.mxu0 0.0
        %1102 = vmatprep.subr.mxu0 0.0
        %1103 = vmatpush2.msra.mxu0 0.0
        %1104 = vmatprep.subr.mxu0 0.0
        %1105 = vmatpush2.msra.mxu0 0.0
        %1106 = vmatprep.subr.mxu0 0.0
        %1107 = vmatpush2.msra.mxu0 0.0
        %1108 = vmatprep.subr.mxu0 0.0
        %1109 = vmatpush2.msra.mxu0 0.0
        %1110 = vmatprep.subr.mxu0 0.0
        %1111 = vmatpush2.msra.mxu0 0.0
        %1112 = vmatprep.subr.mxu0 0.0
        %1113 = vmatpush2.msra.mxu0 0.0
        %1114 = vmatprep.subr.mxu0 0.0
        %1115 = vmatpush2.msra.mxu0 0.0
        %1116 = vmatprep.subr.mxu0 0.0
        %1117 = vmatpush2.msra.mxu0 0.0
        %1118 = vmatprep.subr.mxu0 0.0
        %1119 = vmatpush2.msra.mxu0 0.0
        %1120 = vmatprep.mubr.f32.mxu0 0.0
        %v1121 = vand.u32 %v1049, 4294901760
        %v1122 = vsub.f32 %v1049, %v1121
        %v1123 = vand.u32 %v1122, 4294901760
        %v1124 = vsub.f32 %v1122, %v1123
        %v1125 = vand.u32 %v1124, 4294901760
        %1126 = vmatmul.mubr.f32.gmra.mxu0 %v1125
        %v1127 = vpop.f32.mrf.mxu0
        %v1128 = vadd.f32 0.0, %v1127
        %v1129 = vpop.f32.mrf.mxu0
        %1130 = vmatprep.mubr.f32.mxu0 0.0
        %v1131 = vand.u32 %v1052, 4294901760
        %v1132 = vsub.f32 %v1052, %v1131
        %v1133 = vand.u32 %v1132, 4294901760
        %v1134 = vsub.f32 %v1132, %v1133
        %v1135 = vand.u32 %v1134, 4294901760
        %1136 = vmatmul.mubr.f32.gmra.mxu0 %v1135
        %v1137 = vpop.f32.mrf.mxu0
        %v1138 = vadd.f32 0.0, %v1137
        %v1139 = vpop.f32.mrf.mxu0
        %1140 = vdwg.mxu0
        %1141 = vmatprep.subr.mxu0 0.0
        %1142 = vmatpush1.msra.mxu0 0.0
        %1143 = vmatprep.subr.mxu0 0.0
        %1144 = vmatpush1.msra.mxu0 0.0
        %1145 = vmatprep.subr.mxu0 0.0
        %1146 = vmatpush1.msra.mxu0 0.0
        %1147 = vmatprep.subr.mxu0 0.0
        %1148 = vmatpush1.msra.mxu0 0.0
        %1149 = vmatprep.subr.mxu0 0.0
        %1150 = vmatpush1.msra.mxu0 0.0
        %1151 = vmatprep.subr.mxu0 0.0
        %1152 = vmatpush1.msra.mxu0 0.0
        %1153 = vmatprep.subr.mxu0 0.0
        %1154 = vmatpush1.msra.mxu0 0.0
        %1155 = vmatprep.subr.mxu0 0.0
        %1156 = vmatpush1.msra.mxu0 0.0
        %1157 = vmatprep.subr.mxu0 0.0
        %1158 = vmatpush1.msra.mxu0 0.0
        %1159 = vmatprep.subr.mxu0 0.0
        %1160 = vmatpush1.msra.mxu0 0.0
        %1161 = vmatprep.subr.mxu0 0.0
        %1162 = vmatpush1.msra.mxu0 0.0
        %1163 = vmatprep.subr.mxu0 0.0
        %1164 = vmatpush1.msra.mxu0 0.0
        %1165 = vmatprep.subr.mxu0 0.0
        %1166 = vmatpush1.msra.mxu0 0.0
        %1167 = vmatprep.subr.mxu0 0.0
        %1168 = vmatpush1.msra.mxu0 0.0
        %1169 = vmatprep.subr.mxu0 0.0
        %v1170 = vand.u32 %v1009, 4294901760
        %v1171 = vsub.f32 %v1009, %v1170
        %v1172 = vand.u32 %v1171, 4294901760
        %v1173 = vsub.f32 %v1171, %v1172
        %v1174 = vand.u32 %v1173, 4294901760
        %1175 = vmatpush1.msra.mxu0 %v1174
        %1176 = vmatprep.subr.mxu0 0.0
        %v1177 = vand.u32 %v1003, 4294901760
        %v1178 = vsub.f32 %v1003, %v1177
        %v1179 = vand.u32 %v1178, 4294901760
        %v1180 = vsub.f32 %v1178, %v1179
        %v1181 = vand.u32 %v1180, 4294901760
        %1182 = vmatpush1.msra.mxu0 %v1181
        %1183 = vmatprep.subr.mxu0 0.0
        %1184 = vmatpush2.msra.mxu0 0.0
        %1185 = vmatprep.subr.mxu0 0.0
        %1186 = vmatpush2.msra.mxu0 0.0
        %1187 = vmatprep.subr.mxu0 0.0
        %1188 = vmatpush2.msra.mxu0 0.0
        %1189 = vmatprep.subr.mxu0 0.0
        %1190 = vmatpush2.msra.mxu0 0.0
        %1191 = vmatprep.subr.mxu0 0.0
        %1192 = vmatpush2.msra.mxu0 0.0
        %1193 = vmatprep.subr.mxu0 0.0
        %1194 = vmatpush2.msra.mxu0 0.0
        %1195 = vmatprep.subr.mxu0 0.0
        %1196 = vmatpush2.msra.mxu0 0.0
        %1197 = vmatprep.subr.mxu0 0.0
        %1198 = vmatpush2.msra.mxu0 0.0
        %1199 = vmatprep.subr.mxu0 0.0
        %1200 = vmatpush2.msra.mxu0 0.0
        %1201 = vmatprep.subr.mxu0 0.0
        %1202 = vmatpush2.msra.mxu0 0.0
        %1203 = vmatprep.subr.mxu0 0.0
        %1204 = vmatpush2.msra.mxu0 0.0
        %1205 = vmatprep.subr.mxu0 0.0
        %1206 = vmatpush2.msra.mxu0 0.0
        %1207 = vmatprep.subr.mxu0 0.0
        %1208 = vmatpush2.msra.mxu0 0.0
        %1209 = vmatprep.subr.mxu0 0.0
        %1210 = vmatpush2.msra.mxu0 0.0
        %1211 = vmatprep.subr.mxu0 0.0
        %1212 = vmatpush2.msra.mxu0 0.0
        %1213 = vmatprep.subr.mxu0 0.0
        %1214 = vmatpush2.msra.mxu0 0.0
        %1215 = vmatprep.mubr.f32.mxu0 0.0
        %v1216 = vand.u32 %v1049, 4294901760
        %1217 = vmatmul.mubr.f32.gmra.mxu0 %v1216
        %v1218 = vpop.f32.mrf.mxu0
        %v1219 = vadd.f32 %v1128, %v1218
        %v1220 = vpop.f32.mrf.mxu0
        %1221 = vmatprep.mubr.f32.mxu0 0.0
        %v1222 = vand.u32 %v1052, 4294901760
        %1223 = vmatmul.mubr.f32.gmra.mxu0 %v1222
        %v1224 = vpop.f32.mrf.mxu0
        %v1225 = vadd.f32 %v1138, %v1224
        %v1226 = vpop.f32.mrf.mxu0
        %1227 = vdwg.mxu0
        %1228 = vmatprep.subr.mxu0 0.0
        %1229 = vmatpush1.msra.mxu0 0.0
        %1230 = vmatprep.subr.mxu0 0.0
        %1231 = vmatpush1.msra.mxu0 0.0
        %1232 = vmatprep.subr.mxu0 0.0
        %1233 = vmatpush1.msra.mxu0 0.0
        %1234 = vmatprep.subr.mxu0 0.0
        %1235 = vmatpush1.msra.mxu0 0.0
        %1236 = vmatprep.subr.mxu0 0.0
        %1237 = vmatpush1.msra.mxu0 0.0
        %1238 = vmatprep.subr.mxu0 0.0
        %1239 = vmatpush1.msra.mxu0 0.0
        %1240 = vmatprep.subr.mxu0 0.0
        %1241 = vmatpush1.msra.mxu0 0.0
        %1242 = vmatprep.subr.mxu0 0.0
        %1243 = vmatpush1.msra.mxu0 0.0
        %1244 = vmatprep.subr.mxu0 0.0
        %1245 = vmatpush1.msra.mxu0 0.0
        %1246 = vmatprep.subr.mxu0 0.0
        %1247 = vmatpush1.msra.mxu0 0.0
        %1248 = vmatprep.subr.mxu0 0.0
        %1249 = vmatpush1.msra.mxu0 0.0
        %1250 = vmatprep.subr.mxu0 0.0
        %1251 = vmatpush1.msra.mxu0 0.0
        %1252 = vmatprep.subr.mxu0 0.0
        %1253 = vmatpush1.msra.mxu0 0.0
        %1254 = vmatprep.subr.mxu0 0.0
        %1255 = vmatpush1.msra.mxu0 0.0
        %1256 = vmatprep.subr.mxu0 0.0
        %v1257 = vand.u32 %v1009, 4294901760
        %v1258 = vsub.f32 %v1009, %v1257
        %1259 = vmatpush1.msra.mxu0 %v1258
        %1260 = vmatprep.subr.mxu0 0.0
        %v1261 = vand.u32 %v1003, 4294901760
        %v1262 = vsub.f32 %v1003, %v1261
        %1263 = vmatpush1.msra.mxu0 %v1262
        %1264 = vmatprep.subr.mxu0 0.0
        %1265 = vmatpush2.msra.mxu0 0.0
        %1266 = vmatprep.subr.mxu0 0.0
        %1267 = vmatpush2.msra.mxu0 0.0
        %1268 = vmatprep.subr.mxu0 0.0
        %1269 = vmatpush2.msra.mxu0 0.0
        %1270 = vmatprep.subr.mxu0 0.0
        %1271 = vmatpush2.msra.mxu0 0.0
        %1272 = vmatprep.subr.mxu0 0.0
        %1273 = vmatpush2.msra.mxu0 0.0
        %1274 = vmatprep.subr.mxu0 0.0
        %1275 = vmatpush2.msra.mxu0 0.0
        %1276 = vmatprep.subr.mxu0 0.0
        %1277 = vmatpush2.msra.mxu0 0.0
        %1278 = vmatprep.subr.mxu0 0.0
        %1279 = vmatpush2.msra.mxu0 0.0
        %1280 = vmatprep.subr.mxu0 0.0
        %1281 = vmatpush2.msra.mxu0 0.0
        %1282 = vmatprep.subr.mxu0 0.0
        %1283 = vmatpush2.msra.mxu0 0.0
        %1284 = vmatprep.subr.mxu0 0.0
        %1285 = vmatpush2.msra.mxu0 0.0
        %1286 = vmatprep.subr.mxu0 0.0
        %1287 = vmatpush2.msra.mxu0 0.0
        %1288 = vmatprep.subr.mxu0 0.0
        %1289 = vmatpush2.msra.mxu0 0.0
        %1290 = vmatprep.subr.mxu0 0.0
        %1291 = vmatpush2.msra.mxu0 0.0
        %1292 = vmatprep.subr.mxu0 0.0
        %1293 = vmatpush2.msra.mxu0 0.0
        %1294 = vmatprep.subr.mxu0 0.0
        %1295 = vmatpush2.msra.mxu0 0.0
        %1296 = vmatprep.mubr.f32.mxu0 0.0
        %v1297 = vand.u32 %v1049, 4294901760
        %v1298 = vsub.f32 %v1049, %v1297
        %1299 = vmatmul.mubr.f32.gmra.mxu0 %v1298
        %v1300 = vpop.f32.mrf.mxu0
        %v1301 = vadd.f32 %v1219, %v1300
        %v1302 = vpop.f32.mrf.mxu0
        %1303 = vmatprep.mubr.f32.mxu0 0.0
        %v1304 = vand.u32 %v1052, 4294901760
        %v1305 = vsub.f32 %v1052, %v1304
        %1306 = vmatmul.mubr.f32.gmra.mxu0 %v1305
        %v1307 = vpop.f32.mrf.mxu0
        %v1308 = vadd.f32 %v1225, %v1307
        %v1309 = vpop.f32.mrf.mxu0
        %1310 = vdwg.mxu0
        %1311 = vmatprep.subr.mxu0 0.0
        %1312 = vmatpush1.msra.mxu0 0.0
        %1313 = vmatprep.subr.mxu0 0.0
        %1314 = vmatpush1.msra.mxu0 0.0
        %1315 = vmatprep.subr.mxu0 0.0
        %1316 = vmatpush1.msra.mxu0 0.0
        %1317 = vmatprep.subr.mxu0 0.0
        %1318 = vmatpush1.msra.mxu0 0.0
        %1319 = vmatprep.subr.mxu0 0.0
        %1320 = vmatpush1.msra.mxu0 0.0
        %1321 = vmatprep.subr.mxu0 0.0
        %1322 = vmatpush1.msra.mxu0 0.0
        %1323 = vmatprep.subr.mxu0 0.0
        %1324 = vmatpush1.msra.mxu0 0.0
        %1325 = vmatprep.subr.mxu0 0.0
        %1326 = vmatpush1.msra.mxu0 0.0
        %1327 = vmatprep.subr.mxu0 0.0
        %1328 = vmatpush1.msra.mxu0 0.0
        %1329 = vmatprep.subr.mxu0 0.0
        %1330 = vmatpush1.msra.mxu0 0.0
        %1331 = vmatprep.subr.mxu0 0.0
        %1332 = vmatpush1.msra.mxu0 0.0
        %1333 = vmatprep.subr.mxu0 0.0
        %1334 = vmatpush1.msra.mxu0 0.0
        %1335 = vmatprep.subr.mxu0 0.0
        %1336 = vmatpush1.msra.mxu0 0.0
        %1337 = vmatprep.subr.mxu0 0.0
        %1338 = vmatpush1.msra.mxu0 0.0
        %1339 = vmatprep.subr.mxu0 0.0
        %v1340 = vand.u32 %v1009, 4294901760
        %1341 = vmatpush1.msra.mxu0 %v1340
        %1342 = vmatprep.subr.mxu0 0.0
        %v1343 = vand.u32 %v1003, 4294901760
        %1344 = vmatpush1.msra.mxu0 %v1343
        %1345 = vmatprep.subr.mxu0 0.0
        %1346 = vmatpush2.msra.mxu0 0.0
        %1347 = vmatprep.subr.mxu0 0.0
        %1348 = vmatpush2.msra.mxu0 0.0
        %1349 = vmatprep.subr.mxu0 0.0
        %1350 = vmatpush2.msra.mxu0 0.0
        %1351 = vmatprep.subr.mxu0 0.0
        %1352 = vmatpush2.msra.mxu0 0.0
        %1353 = vmatprep.subr.mxu0 0.0
        %1354 = vmatpush2.msra.mxu0 0.0
        %1355 = vmatprep.subr.mxu0 0.0
        %1356 = vmatpush2.msra.mxu0 0.0
        %1357 = vmatprep.subr.mxu0 0.0
        %1358 = vmatpush2.msra.mxu0 0.0
        %1359 = vmatprep.subr.mxu0 0.0
        %1360 = vmatpush2.msra.mxu0 0.0
        %1361 = vmatprep.subr.mxu0 0.0
        %1362 = vmatpush2.msra.mxu0 0.0
        %1363 = vmatprep.subr.mxu0 0.0
        %1364 = vmatpush2.msra.mxu0 0.0
        %1365 = vmatprep.subr.mxu0 0.0
        %1366 = vmatpush2.msra.mxu0 0.0
        %1367 = vmatprep.subr.mxu0 0.0
        %1368 = vmatpush2.msra.mxu0 0.0
        %1369 = vmatprep.subr.mxu0 0.0
        %1370 = vmatpush2.msra.mxu0 0.0
        %1371 = vmatprep.subr.mxu0 0.0
        %1372 = vmatpush2.msra.mxu0 0.0
        %1373 = vmatprep.subr.mxu0 0.0
        %1374 = vmatpush2.msra.mxu0 0.0
        %1375 = vmatprep.subr.mxu0 0.0
        %1376 = vmatpush2.msra.mxu0 0.0
        %1377 = vmatprep.mubr.f32.mxu0 0.0
        %v1378 = vand.u32 %v1049, 4294901760
        %v1379 = vsub.f32 %v1049, %v1378
        %v1380 = vand.u32 %v1379, 4294901760
        %1381 = vmatmul.mubr.f32.gmra.mxu0 %v1380
        %v1382 = vpop.f32.mrf.mxu0
        %v1383 = vadd.f32 %v1301, %v1382
        %v1384 = vpop.f32.mrf.mxu0
        %1385 = vmatprep.mubr.f32.mxu0 0.0
        %v1386 = vand.u32 %v1052, 4294901760
        %v1387 = vsub.f32 %v1052, %v1386
        %v1388 = vand.u32 %v1387, 4294901760
        %1389 = vmatmul.mubr.f32.gmra.mxu0 %v1388
        %v1390 = vpop.f32.mrf.mxu0
        %v1391 = vadd.f32 %v1308, %v1390
        %v1392 = vpop.f32.mrf.mxu0
        %1393 = vdwg.mxu0
        %1394 = vmatprep.subr.mxu0 0.0
        %1395 = vmatpush1.msra.mxu0 0.0
        %1396 = vmatprep.subr.mxu0 0.0
        %1397 = vmatpush1.msra.mxu0 0.0
        %1398 = vmatprep.subr.mxu0 0.0
        %1399 = vmatpush1.msra.mxu0 0.0
        %1400 = vmatprep.subr.mxu0 0.0
        %1401 = vmatpush1.msra.mxu0 0.0
        %1402 = vmatprep.subr.mxu0 0.0
        %1403 = vmatpush1.msra.mxu0 0.0
        %1404 = vmatprep.subr.mxu0 0.0
        %1405 = vmatpush1.msra.mxu0 0.0
        %1406 = vmatprep.subr.mxu0 0.0
        %1407 = vmatpush1.msra.mxu0 0.0
        %1408 = vmatprep.subr.mxu0 0.0
        %1409 = vmatpush1.msra.mxu0 0.0
        %1410 = vmatprep.subr.mxu0 0.0
        %1411 = vmatpush1.msra.mxu0 0.0
        %1412 = vmatprep.subr.mxu0 0.0
        %1413 = vmatpush1.msra.mxu0 0.0
        %1414 = vmatprep.subr.mxu0 0.0
        %1415 = vmatpush1.msra.mxu0 0.0
        %1416 = vmatprep.subr.mxu0 0.0
        %1417 = vmatpush1.msra.mxu0 0.0
        %1418 = vmatprep.subr.mxu0 0.0
        %1419 = vmatpush1.msra.mxu0 0.0
        %1420 = vmatprep.subr.mxu0 0.0
        %1421 = vmatpush1.msra.mxu0 0.0
        %1422 = vmatprep.subr.mxu0 0.0
        %v1423 = vand.u32 %v1009, 4294901760
        %v1424 = vsub.f32 %v1009, %v1423
        %v1425 = vand.u32 %v1424, 4294901760
        %1426 = vmatpush1.msra.mxu0 %v1425
        %1427 = vmatprep.subr.mxu0 0.0
        %v1428 = vand.u32 %v1003, 4294901760
        %v1429 = vsub.f32 %v1003, %v1428
        %v1430 = vand.u32 %v1429, 4294901760
        %1431 = vmatpush1.msra.mxu0 %v1430
        %1432 = vmatprep.subr.mxu0 0.0
        %1433 = vmatpush2.msra.mxu0 0.0
        %1434 = vmatprep.subr.mxu0 0.0
        %1435 = vmatpush2.msra.mxu0 0.0
        %1436 = vmatprep.subr.mxu0 0.0
        %1437 = vmatpush2.msra.mxu0 0.0
        %1438 = vmatprep.subr.mxu0 0.0
        %1439 = vmatpush2.msra.mxu0 0.0
        %1440 = vmatprep.subr.mxu0 0.0
        %1441 = vmatpush2.msra.mxu0 0.0
        %1442 = vmatprep.subr.mxu0 0.0
        %1443 = vmatpush2.msra.mxu0 0.0
        %1444 = vmatprep.subr.mxu0 0.0
        %1445 = vmatpush2.msra.mxu0 0.0
        %1446 = vmatprep.subr.mxu0 0.0
        %1447 = vmatpush2.msra.mxu0 0.0
        %1448 = vmatprep.subr.mxu0 0.0
        %1449 = vmatpush2.msra.mxu0 0.0
        %1450 = vmatprep.subr.mxu0 0.0
        %1451 = vmatpush2.msra.mxu0 0.0
        %1452 = vmatprep.subr.mxu0 0.0
        %1453 = vmatpush2.msra.mxu0 0.0
        %1454 = vmatprep.subr.mxu0 0.0
        %1455 = vmatpush2.msra.mxu0 0.0
        %1456 = vmatprep.subr.mxu0 0.0
        %1457 = vmatpush2.msra.mxu0 0.0
        %1458 = vmatprep.subr.mxu0 0.0
        %1459 = vmatpush2.msra.mxu0 0.0
        %1460 = vmatprep.subr.mxu0 0.0
        %1461 = vmatpush2.msra.mxu0 0.0
        %1462 = vmatprep.subr.mxu0 0.0
        %1463 = vmatpush2.msra.mxu0 0.0
        %1464 = vmatprep.mubr.f32.mxu0 0.0
        %v1465 = vand.u32 %v1049, 4294901760
        %1466 = vmatmul.mubr.f32.gmra.mxu0 %v1465
        %v1467 = vpop.f32.mrf.mxu0
        %v1468 = vadd.f32 %v1383, %v1467
        %v1469 = vpop.f32.mrf.mxu0
        %1470 = vmatprep.mubr.f32.mxu0 0.0
        %v1471 = vand.u32 %v1052, 4294901760
        %1472 = vmatmul.mubr.f32.gmra.mxu0 %v1471
        %v1473 = vpop.f32.mrf.mxu0
        %v1474 = vadd.f32 %v1391, %v1473
        %v1475 = vpop.f32.mrf.mxu0
        %1476 = vdwg.mxu0
        %1477 = vmatprep.subr.mxu0 0.0
        %1478 = vmatpush1.msra.mxu0 0.0
        %1479 = vmatprep.subr.mxu0 0.0
        %1480 = vmatpush1.msra.mxu0 0.0
        %1481 = vmatprep.subr.mxu0 0.0
        %1482 = vmatpush1.msra.mxu0 0.0
        %1483 = vmatprep.subr.mxu0 0.0
        %1484 = vmatpush1.msra.mxu0 0.0
        %1485 = vmatprep.subr.mxu0 0.0
        %1486 = vmatpush1.msra.mxu0 0.0
        %1487 = vmatprep.subr.mxu0 0.0
        %1488 = vmatpush1.msra.mxu0 0.0
        %1489 = vmatprep.subr.mxu0 0.0
        %1490 = vmatpush1.msra.mxu0 0.0
        %1491 = vmatprep.subr.mxu0 0.0
        %1492 = vmatpush1.msra.mxu0 0.0
        %1493 = vmatprep.subr.mxu0 0.0
        %1494 = vmatpush1.msra.mxu0 0.0
        %1495 = vmatprep.subr.mxu0 0.0
        %1496 = vmatpush1.msra.mxu0 0.0
        %1497 = vmatprep.subr.mxu0 0.0
        %1498 = vmatpush1.msra.mxu0 0.0
        %1499 = vmatprep.subr.mxu0 0.0
        %1500 = vmatpush1.msra.mxu0 0.0
        %1501 = vmatprep.subr.mxu0 0.0
        %1502 = vmatpush1.msra.mxu0 0.0
        %1503 = vmatprep.subr.mxu0 0.0
        %1504 = vmatpush1.msra.mxu0 0.0
        %1505 = vmatprep.subr.mxu0 0.0
        %v1506 = vand.u32 %v1009, 4294901760
        %1507 = vmatpush1.msra.mxu0 %v1506
        %1508 = vmatprep.subr.mxu0 0.0
        %v1509 = vand.u32 %v1003, 4294901760
        %1510 = vmatpush1.msra.mxu0 %v1509
        %1511 = vmatprep.subr.mxu0 0.0
        %1512 = vmatpush2.msra.mxu0 0.0
        %1513 = vmatprep.subr.mxu0 0.0
        %1514 = vmatpush2.msra.mxu0 0.0
        %1515 = vmatprep.subr.mxu0 0.0
        %1516 = vmatpush2.msra.mxu0 0.0
        %1517 = vmatprep.subr.mxu0 0.0
        %1518 = vmatpush2.msra.mxu0 0.0
        %1519 = vmatprep.subr.mxu0 0.0
        %1520 = vmatpush2.msra.mxu0 0.0
        %1521 = vmatprep.subr.mxu0 0.0
        %1522 = vmatpush2.msra.mxu0 0.0
        %1523 = vmatprep.subr.mxu0 0.0
        %1524 = vmatpush2.msra.mxu0 0.0
        %1525 = vmatprep.subr.mxu0 0.0
        %1526 = vmatpush2.msra.mxu0 0.0
        %1527 = vmatprep.subr.mxu0 0.0
        %1528 = vmatpush2.msra.mxu0 0.0
        %1529 = vmatprep.subr.mxu0 0.0
        %1530 = vmatpush2.msra.mxu0 0.0
        %1531 = vmatprep.subr.mxu0 0.0
        %1532 = vmatpush2.msra.mxu0 0.0
        %1533 = vmatprep.subr.mxu0 0.0
        %1534 = vmatpush2.msra.mxu0 0.0
        %1535 = vmatprep.subr.mxu0 0.0
        %1536 = vmatpush2.msra.mxu0 0.0
        %1537 = vmatprep.subr.mxu0 0.0
        %1538 = vmatpush2.msra.mxu0 0.0
        %1539 = vmatprep.subr.mxu0 0.0
        %1540 = vmatpush2.msra.mxu0 0.0
        %1541 = vmatprep.subr.mxu0 0.0
        %1542 = vmatpush2.msra.mxu0 0.0
        %1543 = vmatprep.mubr.f32.mxu0 0.0
        %v1544 = vand.u32 %v1049, 4294901760
        %1545 = vmatmul.mubr.f32.gmra.mxu0 %v1544
        %v1546 = vpop.f32.mrf.mxu0
        %v1547 = vadd.f32 %v1468, %v1546
        %v1548 = vpop.f32.mrf.mxu0
        %1549 = vmatprep.mubr.f32.mxu0 0.0
        %v1550 = vand.u32 %v1052, 4294901760
        %1551 = vmatmul.mubr.f32.gmra.mxu0 %v1550
        %v1552 = vpop.f32.mrf.mxu0
        %v1553 = vadd.f32 %v1474, %v1552
        %v1554 = vpop.f32.mrf.mxu0
        %1555 = vdwg.mxu0
        %1556 = vmatprep.subr.mxu0 0.0
        %1557 = vmatpush1.msra.mxu0 0.0
        %1558 = vmatprep.subr.mxu0 0.0
        %1559 = vmatpush1.msra.mxu0 0.0
        %1560 = vmatprep.subr.mxu0 0.0
        %1561 = vmatpush1.msra.mxu0 0.0
        %1562 = vmatprep.subr.mxu0 0.0
        %1563 = vmatpush1.msra.mxu0 0.0
        %1564 = vmatprep.subr.mxu0 0.0
        %1565 = vmatpush1.msra.mxu0 0.0
        %1566 = vmatprep.subr.mxu0 0.0
        %1567 = vmatpush1.msra.mxu0 0.0
        %1568 = vmatprep.subr.mxu0 0.0
        %1569 = vmatpush1.msra.mxu0 0.0
        %1570 = vmatprep.subr.mxu0 0.0
        %1571 = vmatpush1.msra.mxu0 0.0
        %1572 = vmatprep.subr.mxu0 0.0
        %1573 = vmatpush1.msra.mxu0 0.0
        %1574 = vmatprep.subr.mxu0 0.0
        %1575 = vmatpush1.msra.mxu0 0.0
        %1576 = vmatprep.subr.mxu0 0.0
        %1577 = vmatpush1.msra.mxu0 0.0
        %1578 = vmatprep.subr.mxu0 0.0
        %1579 = vmatpush1.msra.mxu0 0.0
        %1580 = vmatprep.subr.mxu0 0.0
        %1581 = vmatpush1.msra.mxu0 0.0
        %1582 = vmatprep.subr.mxu0 0.0
        %1583 = vmatpush1.msra.mxu0 0.0
        %1584 = vmatprep.subr.mxu0 0.0
        %v1585 = vand.u32 %v1021, 4294901760
        %1586 = vmatpush1.msra.mxu0 %v1585
        %1587 = vmatprep.subr.mxu0 0.0
        %v1588 = vand.u32 %v1015, 4294901760
        %1589 = vmatpush1.msra.mxu0 %v1588
        %1590 = vmatprep.subr.mxu0 0.0
        %1591 = vmatpush2.msra.mxu0 0.0
        %1592 = vmatprep.subr.mxu0 0.0
        %1593 = vmatpush2.msra.mxu0 0.0
        %1594 = vmatprep.subr.mxu0 0.0
        %1595 = vmatpush2.msra.mxu0 0.0
        %1596 = vmatprep.subr.mxu0 0.0
        %1597 = vmatpush2.msra.mxu0 0.0
        %1598 = vmatprep.subr.mxu0 0.0
        %1599 = vmatpush2.msra.mxu0 0.0
        %1600 = vmatprep.subr.mxu0 0.0
        %1601 = vmatpush2.msra.mxu0 0.0
        %1602 = vmatprep.subr.mxu0 0.0
        %1603 = vmatpush2.msra.mxu0 0.0
        %1604 = vmatprep.subr.mxu0 0.0
        %1605 = vmatpush2.msra.mxu0 0.0
        %1606 = vmatprep.subr.mxu0 0.0
        %1607 = vmatpush2.msra.mxu0 0.0
        %1608 = vmatprep.subr.mxu0 0.0
        %1609 = vmatpush2.msra.mxu0 0.0
        %1610 = vmatprep.subr.mxu0 0.0
        %1611 = vmatpush2.msra.mxu0 0.0
        %1612 = vmatprep.subr.mxu0 0.0
        %1613 = vmatpush2.msra.mxu0 0.0
        %1614 = vmatprep.subr.mxu0 0.0
        %1615 = vmatpush2.msra.mxu0 0.0
        %1616 = vmatprep.subr.mxu0 0.0
        %1617 = vmatpush2.msra.mxu0 0.0
        %1618 = vmatprep.subr.mxu0 0.0
        %1619 = vmatpush2.msra.mxu0 0.0
        %1620 = vmatprep.subr.mxu0 0.0
        %1621 = vmatpush2.msra.mxu0 0.0
        %1622 = vmatprep.mubr.f32.mxu0 0.0
        %v1623 = vand.u32 %v1049, 4294901760
        %v1624 = vsub.f32 %v1049, %v1623
        %v1625 = vand.u32 %v1624, 4294901760
        %v1626 = vsub.f32 %v1624, %v1625
        %v1627 = vand.u32 %v1626, 4294901760
        %1628 = vmatmul.mubr.f32.gmra.mxu0 %v1627
        %v1629 = vpop.f32.mrf.mxu0
        %v1630 = vadd.f32 0.0, %v1629
        %v1631 = vpop.f32.mrf.mxu0
        %1632 = vmatprep.mubr.f32.mxu0 0.0
        %v1633 = vand.u32 %v1052, 4294901760
        %v1634 = vsub.f32 %v1052, %v1633
        %v1635 = vand.u32 %v1634, 4294901760
        %v1636 = vsub.f32 %v1634, %v1635
        %v1637 = vand.u32 %v1636, 4294901760
        %1638 = vmatmul.mubr.f32.gmra.mxu0 %v1637
        %v1639 = vpop.f32.mrf.mxu0
        %v1640 = vadd.f32 0.0, %v1639
        %v1641 = vpop.f32.mrf.mxu0
        %1642 = vdwg.mxu0
        %1643 = vmatprep.subr.mxu0 0.0
        %1644 = vmatpush1.msra.mxu0 0.0
        %1645 = vmatprep.subr.mxu0 0.0
        %1646 = vmatpush1.msra.mxu0 0.0
        %1647 = vmatprep.subr.mxu0 0.0
        %1648 = vmatpush1.msra.mxu0 0.0
        %1649 = vmatprep.subr.mxu0 0.0
        %1650 = vmatpush1.msra.mxu0 0.0
        %1651 = vmatprep.subr.mxu0 0.0
        %1652 = vmatpush1.msra.mxu0 0.0
        %1653 = vmatprep.subr.mxu0 0.0
        %1654 = vmatpush1.msra.mxu0 0.0
        %1655 = vmatprep.subr.mxu0 0.0
        %1656 = vmatpush1.msra.mxu0 0.0
        %1657 = vmatprep.subr.mxu0 0.0
        %1658 = vmatpush1.msra.mxu0 0.0
        %1659 = vmatprep.subr.mxu0 0.0
        %1660 = vmatpush1.msra.mxu0 0.0
        %1661 = vmatprep.subr.mxu0 0.0
        %1662 = vmatpush1.msra.mxu0 0.0
        %1663 = vmatprep.subr.mxu0 0.0
        %1664 = vmatpush1.msra.mxu0 0.0
        %1665 = vmatprep.subr.mxu0 0.0
        %1666 = vmatpush1.msra.mxu0 0.0
        %1667 = vmatprep.subr.mxu0 0.0
        %1668 = vmatpush1.msra.mxu0 0.0
        %1669 = vmatprep.subr.mxu0 0.0
        %1670 = vmatpush1.msra.mxu0 0.0
        %1671 = vmatprep.subr.mxu0 0.0
        %v1672 = vand.u32 %v1021, 4294901760
        %v1673 = vsub.f32 %v1021, %v1672
        %v1674 = vand.u32 %v1673, 4294901760
        %v1675 = vsub.f32 %v1673, %v1674
        %v1676 = vand.u32 %v1675, 4294901760
        %1677 = vmatpush1.msra.mxu0 %v1676
        %1678 = vmatprep.subr.mxu0 0.0
        %v1679 = vand.u32 %v1015, 4294901760
        %v1680 = vsub.f32 %v1015, %v1679
        %v1681 = vand.u32 %v1680, 4294901760
        %v1682 = vsub.f32 %v1680, %v1681
        %v1683 = vand.u32 %v1682, 4294901760
        %1684 = vmatpush1.msra.mxu0 %v1683
        %1685 = vmatprep.subr.mxu0 0.0
        %1686 = vmatpush2.msra.mxu0 0.0
        %1687 = vmatprep.subr.mxu0 0.0
        %1688 = vmatpush2.msra.mxu0 0.0
        %1689 = vmatprep.subr.mxu0 0.0
        %1690 = vmatpush2.msra.mxu0 0.0
        %1691 = vmatprep.subr.mxu0 0.0
        %1692 = vmatpush2.msra.mxu0 0.0
        %1693 = vmatprep.subr.mxu0 0.0
        %1694 = vmatpush2.msra.mxu0 0.0
        %1695 = vmatprep.subr.mxu0 0.0
        %1696 = vmatpush2.msra.mxu0 0.0
        %1697 = vmatprep.subr.mxu0 0.0
        %1698 = vmatpush2.msra.mxu0 0.0
        %1699 = vmatprep.subr.mxu0 0.0
        %1700 = vmatpush2.msra.mxu0 0.0
        %1701 = vmatprep.subr.mxu0 0.0
        %1702 = vmatpush2.msra.mxu0 0.0
        %1703 = vmatprep.subr.mxu0 0.0
        %1704 = vmatpush2.msra.mxu0 0.0
        %1705 = vmatprep.subr.mxu0 0.0
        %1706 = vmatpush2.msra.mxu0 0.0
        %1707 = vmatprep.subr.mxu0 0.0
        %1708 = vmatpush2.msra.mxu0 0.0
        %1709 = vmatprep.subr.mxu0 0.0
        %1710 = vmatpush2.msra.mxu0 0.0
        %1711 = vmatprep.subr.mxu0 0.0
        %1712 = vmatpush2.msra.mxu0 0.0
        %1713 = vmatprep.subr.mxu0 0.0
        %1714 = vmatpush2.msra.mxu0 0.0
        %1715 = vmatprep.subr.mxu0 0.0
        %1716 = vmatpush2.msra.mxu0 0.0
        %1717 = vmatprep.mubr.f32.mxu0 0.0
        %v1718 = vand.u32 %v1049, 4294901760
        %1719 = vmatmul.mubr.f32.gmra.mxu0 %v1718
        %v1720 = vpop.f32.mrf.mxu0
        %v1721 = vadd.f32 %v1630, %v1720
        %v1722 = vpop.f32.mrf.mxu0
        %1723 = vmatprep.mubr.f32.mxu0 0.0
        %v1724 = vand.u32 %v1052, 4294901760
        %1725 = vmatmul.mubr.f32.gmra.mxu0 %v1724
        %v1726 = vpop.f32.mrf.mxu0
        %v1727 = vadd.f32 %v1640, %v1726
        %v1728 = vpop.f32.mrf.mxu0
        %1729 = vdwg.mxu0
        %1730 = vmatprep.subr.mxu0 0.0
        %1731 = vmatpush1.msra.mxu0 0.0
        %1732 = vmatprep.subr.mxu0 0.0
        %1733 = vmatpush1.msra.mxu0 0.0
        %1734 = vmatprep.subr.mxu0 0.0
        %1735 = vmatpush1.msra.mxu0 0.0
        %1736 = vmatprep.subr.mxu0 0.0
        %1737 = vmatpush1.msra.mxu0 0.0
        %1738 = vmatprep.subr.mxu0 0.0
        %1739 = vmatpush1.msra.mxu0 0.0
        %1740 = vmatprep.subr.mxu0 0.0
        %1741 = vmatpush1.msra.mxu0 0.0
        %1742 = vmatprep.subr.mxu0 0.0
        %1743 = vmatpush1.msra.mxu0 0.0
        %1744 = vmatprep.subr.mxu0 0.0
        %1745 = vmatpush1.msra.mxu0 0.0
        %1746 = vmatprep.subr.mxu0 0.0
        %1747 = vmatpush1.msra.mxu0 0.0
        %1748 = vmatprep.subr.mxu0 0.0
        %1749 = vmatpush1.msra.mxu0 0.0
        %1750 = vmatprep.subr.mxu0 0.0
        %1751 = vmatpush1.msra.mxu0 0.0
        %1752 = vmatprep.subr.mxu0 0.0
        %1753 = vmatpush1.msra.mxu0 0.0
        %1754 = vmatprep.subr.mxu0 0.0
        %1755 = vmatpush1.msra.mxu0 0.0
        %1756 = vmatprep.subr.mxu0 0.0
        %1757 = vmatpush1.msra.mxu0 0.0
        %1758 = vmatprep.subr.mxu0 0.0
        %v1759 = vand.u32 %v1021, 4294901760
        %v1760 = vsub.f32 %v1021, %v1759
        %1761 = vmatpush1.msra.mxu0 %v1760
        %1762 = vmatprep.subr.mxu0 0.0
        %v1763 = vand.u32 %v1015, 4294901760
        %v1764 = vsub.f32 %v1015, %v1763
        %1765 = vmatpush1.msra.mxu0 %v1764
        %1766 = vmatprep.subr.mxu0 0.0
        %1767 = vmatpush2.msra.mxu0 0.0
        %1768 = vmatprep.subr.mxu0 0.0
        %1769 = vmatpush2.msra.mxu0 0.0
        %1770 = vmatprep.subr.mxu0 0.0
        %1771 = vmatpush2.msra.mxu0 0.0
        %1772 = vmatprep.subr.mxu0 0.0
        %1773 = vmatpush2.msra.mxu0 0.0
        %1774 = vmatprep.subr.mxu0 0.0
        %1775 = vmatpush2.msra.mxu0 0.0
        %1776 = vmatprep.subr.mxu0 0.0
        %1777 = vmatpush2.msra.mxu0 0.0
        %1778 = vmatprep.subr.mxu0 0.0
        %1779 = vmatpush2.msra.mxu0 0.0
        %1780 = vmatprep.subr.mxu0 0.0
        %1781 = vmatpush2.msra.mxu0 0.0
        %1782 = vmatprep.subr.mxu0 0.0
        %1783 = vmatpush2.msra.mxu0 0.0
        %1784 = vmatprep.subr.mxu0 0.0
        %1785 = vmatpush2.msra.mxu0 0.0
        %1786 = vmatprep.subr.mxu0 0.0
        %1787 = vmatpush2.msra.mxu0 0.0
        %1788 = vmatprep.subr.mxu0 0.0
        %1789 = vmatpush2.msra.mxu0 0.0
        %1790 = vmatprep.subr.mxu0 0.0
        %1791 = vmatpush2.msra.mxu0 0.0
        %1792 = vmatprep.subr.mxu0 0.0
        %1793 = vmatpush2.msra.mxu0 0.0
        %1794 = vmatprep.subr.mxu0 0.0
        %1795 = vmatpush2.msra.mxu0 0.0
        %1796 = vmatprep.subr.mxu0 0.0
        %1797 = vmatpush2.msra.mxu0 0.0
        %1798 = vmatprep.mubr.f32.mxu0 0.0
        %v1799 = vand.u32 %v1049, 4294901760
        %v1800 = vsub.f32 %v1049, %v1799
        %1801 = vmatmul.mubr.f32.gmra.mxu0 %v1800
        %v1802 = vpop.f32.mrf.mxu0
        %v1803 = vadd.f32 %v1721, %v1802
        %v1804 = vpop.f32.mrf.mxu0
        %1805 = vmatprep.mubr.f32.mxu0 0.0
        %v1806 = vand.u32 %v1052, 4294901760
        %v1807 = vsub.f32 %v1052, %v1806
        %1808 = vmatmul.mubr.f32.gmra.mxu0 %v1807
        %v1809 = vpop.f32.mrf.mxu0
        %v1810 = vadd.f32 %v1727, %v1809
        %v1811 = vpop.f32.mrf.mxu0
        %1812 = vdwg.mxu0
        %1813 = vmatprep.subr.mxu0 0.0
        %1814 = vmatpush1.msra.mxu0 0.0
        %1815 = vmatprep.subr.mxu0 0.0
        %1816 = vmatpush1.msra.mxu0 0.0
        %1817 = vmatprep.subr.mxu0 0.0
        %1818 = vmatpush1.msra.mxu0 0.0
        %1819 = vmatprep.subr.mxu0 0.0
        %1820 = vmatpush1.msra.mxu0 0.0
        %1821 = vmatprep.subr.mxu0 0.0
        %1822 = vmatpush1.msra.mxu0 0.0
        %1823 = vmatprep.subr.mxu0 0.0
        %1824 = vmatpush1.msra.mxu0 0.0
        %1825 = vmatprep.subr.mxu0 0.0
        %1826 = vmatpush1.msra.mxu0 0.0
        %1827 = vmatprep.subr.mxu0 0.0
        %1828 = vmatpush1.msra.mxu0 0.0
        %1829 = vmatprep.subr.mxu0 0.0
        %1830 = vmatpush1.msra.mxu0 0.0
        %1831 = vmatprep.subr.mxu0 0.0
        %1832 = vmatpush1.msra.mxu0 0.0
        %1833 = vmatprep.subr.mxu0 0.0
        %1834 = vmatpush1.msra.mxu0 0.0
        %1835 = vmatprep.subr.mxu0 0.0
        %1836 = vmatpush1.msra.mxu0 0.0
        %1837 = vmatprep.subr.mxu0 0.0
        %1838 = vmatpush1.msra.mxu0 0.0
        %1839 = vmatprep.subr.mxu0 0.0
        %1840 = vmatpush1.msra.mxu0 0.0
        %1841 = vmatprep.subr.mxu0 0.0
        %v1842 = vand.u32 %v1021, 4294901760
        %1843 = vmatpush1.msra.mxu0 %v1842
        %1844 = vmatprep.subr.mxu0 0.0
        %v1845 = vand.u32 %v1015, 4294901760
        %1846 = vmatpush1.msra.mxu0 %v1845
        %1847 = vmatprep.subr.mxu0 0.0
        %1848 = vmatpush2.msra.mxu0 0.0
        %1849 = vmatprep.subr.mxu0 0.0
        %1850 = vmatpush2.msra.mxu0 0.0
        %1851 = vmatprep.subr.mxu0 0.0
        %1852 = vmatpush2.msra.mxu0 0.0
        %1853 = vmatprep.subr.mxu0 0.0
        %1854 = vmatpush2.msra.mxu0 0.0
        %1855 = vmatprep.subr.mxu0 0.0
        %1856 = vmatpush2.msra.mxu0 0.0
        %1857 = vmatprep.subr.mxu0 0.0
        %1858 = vmatpush2.msra.mxu0 0.0
        %1859 = vmatprep.subr.mxu0 0.0
        %1860 = vmatpush2.msra.mxu0 0.0
        %1861 = vmatprep.subr.mxu0 0.0
        %1862 = vmatpush2.msra.mxu0 0.0
        %1863 = vmatprep.subr.mxu0 0.0
        %1864 = vmatpush2.msra.mxu0 0.0
        %1865 = vmatprep.subr.mxu0 0.0
        %1866 = vmatpush2.msra.mxu0 0.0
        %1867 = vmatprep.subr.mxu0 0.0
        %1868 = vmatpush2.msra.mxu0 0.0
        %1869 = vmatprep.subr.mxu0 0.0
        %1870 = vmatpush2.msra.mxu0 0.0
        %1871 = vmatprep.subr.mxu0 0.0
        %1872 = vmatpush2.msra.mxu0 0.0
        %1873 = vmatprep.subr.mxu0 0.0
        %1874 = vmatpush2.msra.mxu0 0.0
        %1875 = vmatprep.subr.mxu0 0.0
        %1876 = vmatpush2.msra.mxu0 0.0
        %1877 = vmatprep.subr.mxu0 0.0
        %1878 = vmatpush2.msra.mxu0 0.0
        %1879 = vmatprep.mubr.f32.mxu0 0.0
        %v1880 = vand.u32 %v1049, 4294901760
        %v1881 = vsub.f32 %v1049, %v1880
        %v1882 = vand.u32 %v1881, 4294901760
        %1883 = vmatmul.mubr.f32.gmra.mxu0 %v1882
        %v1884 = vpop.f32.mrf.mxu0
        %v1885 = vadd.f32 %v1803, %v1884
        %v1886 = vpop.f32.mrf.mxu0
        %1887 = vmatprep.mubr.f32.mxu0 0.0
        %v1888 = vand.u32 %v1052, 4294901760
        %v1889 = vsub.f32 %v1052, %v1888
        %v1890 = vand.u32 %v1889, 4294901760
        %1891 = vmatmul.mubr.f32.gmra.mxu0 %v1890
        %v1892 = vpop.f32.mrf.mxu0
        %v1893 = vadd.f32 %v1810, %v1892
        %v1894 = vpop.f32.mrf.mxu0
        %1895 = vdwg.mxu0
        %1896 = vmatprep.subr.mxu0 0.0
        %1897 = vmatpush1.msra.mxu0 0.0
        %1898 = vmatprep.subr.mxu0 0.0
        %1899 = vmatpush1.msra.mxu0 0.0
        %1900 = vmatprep.subr.mxu0 0.0
        %1901 = vmatpush1.msra.mxu0 0.0
        %1902 = vmatprep.subr.mxu0 0.0
        %1903 = vmatpush1.msra.mxu0 0.0
        %1904 = vmatprep.subr.mxu0 0.0
        %1905 = vmatpush1.msra.mxu0 0.0
        %1906 = vmatprep.subr.mxu0 0.0
        %1907 = vmatpush1.msra.mxu0 0.0
        %1908 = vmatprep.subr.mxu0 0.0
        %1909 = vmatpush1.msra.mxu0 0.0
        %1910 = vmatprep.subr.mxu0 0.0
        %1911 = vmatpush1.msra.mxu0 0.0
        %1912 = vmatprep.subr.mxu0 0.0
        %1913 = vmatpush1.msra.mxu0 0.0
        %1914 = vmatprep.subr.mxu0 0.0
        %1915 = vmatpush1.msra.mxu0 0.0
        %1916 = vmatprep.subr.mxu0 0.0
        %1917 = vmatpush1.msra.mxu0 0.0
        %1918 = vmatprep.subr.mxu0 0.0
        %1919 = vmatpush1.msra.mxu0 0.0
        %1920 = vmatprep.subr.mxu0 0.0
        %1921 = vmatpush1.msra.mxu0 0.0
        %1922 = vmatprep.subr.mxu0 0.0
        %1923 = vmatpush1.msra.mxu0 0.0
        %1924 = vmatprep.subr.mxu0 0.0
        %v1925 = vand.u32 %v1021, 4294901760
        %v1926 = vsub.f32 %v1021, %v1925
        %v1927 = vand.u32 %v1926, 4294901760
        %1928 = vmatpush1.msra.mxu0 %v1927
        %1929 = vmatprep.subr.mxu0 0.0
        %v1930 = vand.u32 %v1015, 4294901760
        %v1931 = vsub.f32 %v1015, %v1930
        %v1932 = vand.u32 %v1931, 4294901760
        %1933 = vmatpush1.msra.mxu0 %v1932
        %1934 = vmatprep.subr.mxu0 0.0
        %1935 = vmatpush2.msra.mxu0 0.0
        %1936 = vmatprep.subr.mxu0 0.0
        %1937 = vmatpush2.msra.mxu0 0.0
        %1938 = vmatprep.subr.mxu0 0.0
        %1939 = vmatpush2.msra.mxu0 0.0
        %1940 = vmatprep.subr.mxu0 0.0
        %1941 = vmatpush2.msra.mxu0 0.0
        %1942 = vmatprep.subr.mxu0 0.0
        %1943 = vmatpush2.msra.mxu0 0.0
        %1944 = vmatprep.subr.mxu0 0.0
        %1945 = vmatpush2.msra.mxu0 0.0
        %1946 = vmatprep.subr.mxu0 0.0
        %1947 = vmatpush2.msra.mxu0 0.0
        %1948 = vmatprep.subr.mxu0 0.0
        %1949 = vmatpush2.msra.mxu0 0.0
        %1950 = vmatprep.subr.mxu0 0.0
        %1951 = vmatpush2.msra.mxu0 0.0
        %1952 = vmatprep.subr.mxu0 0.0
        %1953 = vmatpush2.msra.mxu0 0.0
        %1954 = vmatprep.subr.mxu0 0.0
        %1955 = vmatpush2.msra.mxu0 0.0
        %1956 = vmatprep.subr.mxu0 0.0
        %1957 = vmatpush2.msra.mxu0 0.0
        %1958 = vmatprep.subr.mxu0 0.0
        %1959 = vmatpush2.msra.mxu0 0.0
        %1960 = vmatprep.subr.mxu0 0.0
        %1961 = vmatpush2.msra.mxu0 0.0
        %1962 = vmatprep.subr.mxu0 0.0
        %1963 = vmatpush2.msra.mxu0 0.0
        %1964 = vmatprep.subr.mxu0 0.0
        %1965 = vmatpush2.msra.mxu0 0.0
        %1966 = vmatprep.mubr.f32.mxu0 0.0
        %v1967 = vand.u32 %v1049, 4294901760
        %1968 = vmatmul.mubr.f32.gmra.mxu0 %v1967
        %v1969 = vpop.f32.mrf.mxu0
        %v1970 = vadd.f32 %v1885, %v1969
        %v1971 = vpop.f32.mrf.mxu0
        %1972 = vmatprep.mubr.f32.mxu0 0.0
        %v1973 = vand.u32 %v1052, 4294901760
        %1974 = vmatmul.mubr.f32.gmra.mxu0 %v1973
        %v1975 = vpop.f32.mrf.mxu0
        %v1976 = vadd.f32 %v1893, %v1975
        %v1977 = vpop.f32.mrf.mxu0
        %1978 = vdwg.mxu0
        %1979 = vmatprep.subr.mxu0 0.0
        %1980 = vmatpush1.msra.mxu0 0.0
        %1981 = vmatprep.subr.mxu0 0.0
        %1982 = vmatpush1.msra.mxu0 0.0
        %1983 = vmatprep.subr.mxu0 0.0
        %1984 = vmatpush1.msra.mxu0 0.0
        %1985 = vmatprep.subr.mxu0 0.0
        %1986 = vmatpush1.msra.mxu0 0.0
        %1987 = vmatprep.subr.mxu0 0.0
        %1988 = vmatpush1.msra.mxu0 0.0
        %1989 = vmatprep.subr.mxu0 0.0
        %1990 = vmatpush1.msra.mxu0 0.0
        %1991 = vmatprep.subr.mxu0 0.0
        %1992 = vmatpush1.msra.mxu0 0.0
        %1993 = vmatprep.subr.mxu0 0.0
        %1994 = vmatpush1.msra.mxu0 0.0
        %1995 = vmatprep.subr.mxu0 0.0
        %1996 = vmatpush1.msra.mxu0 0.0
        %1997 = vmatprep.subr.mxu0 0.0
        %1998 = vmatpush1.msra.mxu0 0.0
        %1999 = vmatprep.subr.mxu0 0.0
        %2000 = vmatpush1.msra.mxu0 0.0
        %2001 = vmatprep.subr.mxu0 0.0
        %2002 = vmatpush1.msra.mxu0 0.0
        %2003 = vmatprep.subr.mxu0 0.0
        %2004 = vmatpush1.msra.mxu0 0.0
        %2005 = vmatprep.subr.mxu0 0.0
        %2006 = vmatpush1.msra.mxu0 0.0
        %2007 = vmatprep.subr.mxu0 0.0
        %v2008 = vand.u32 %v1021, 4294901760
        %2009 = vmatpush1.msra.mxu0 %v2008
        %2010 = vmatprep.subr.mxu0 0.0
        %v2011 = vand.u32 %v1015, 4294901760
        %2012 = vmatpush1.msra.mxu0 %v2011
        %2013 = vmatprep.subr.mxu0 0.0
        %2014 = vmatpush2.msra.mxu0 0.0
        %2015 = vmatprep.subr.mxu0 0.0
        %2016 = vmatpush2.msra.mxu0 0.0
        %2017 = vmatprep.subr.mxu0 0.0
        %2018 = vmatpush2.msra.mxu0 0.0
        %2019 = vmatprep.subr.mxu0 0.0
        %2020 = vmatpush2.msra.mxu0 0.0
        %2021 = vmatprep.subr.mxu0 0.0
        %2022 = vmatpush2.msra.mxu0 0.0
        %2023 = vmatprep.subr.mxu0 0.0
        %2024 = vmatpush2.msra.mxu0 0.0
        %2025 = vmatprep.subr.mxu0 0.0
        %2026 = vmatpush2.msra.mxu0 0.0
        %2027 = vmatprep.subr.mxu0 0.0
        %2028 = vmatpush2.msra.mxu0 0.0
        %2029 = vmatprep.subr.mxu0 0.0
        %2030 = vmatpush2.msra.mxu0 0.0
        %2031 = vmatprep.subr.mxu0 0.0
        %2032 = vmatpush2.msra.mxu0 0.0
        %2033 = vmatprep.subr.mxu0 0.0
        %2034 = vmatpush2.msra.mxu0 0.0
        %2035 = vmatprep.subr.mxu0 0.0
        %2036 = vmatpush2.msra.mxu0 0.0
        %2037 = vmatprep.subr.mxu0 0.0
        %2038 = vmatpush2.msra.mxu0 0.0
        %2039 = vmatprep.subr.mxu0 0.0
        %2040 = vmatpush2.msra.mxu0 0.0
        %2041 = vmatprep.subr.mxu0 0.0
        %2042 = vmatpush2.msra.mxu0 0.0
        %2043 = vmatprep.subr.mxu0 0.0
        %2044 = vmatpush2.msra.mxu0 0.0
        %2045 = vmatprep.mubr.f32.mxu0 0.0
        %v2046 = vand.u32 %v1049, 4294901760
        %2047 = vmatmul.mubr.f32.gmra.mxu0 %v2046
        %v2048 = vpop.f32.mrf.mxu0
        %v2049 = vadd.f32 %v1970, %v2048
        %v2050 = vpop.f32.mrf.mxu0
        %2051 = vmatprep.mubr.f32.mxu0 0.0
        %v2052 = vand.u32 %v1052, 4294901760
        %2053 = vmatmul.mubr.f32.gmra.mxu0 %v2052
        %v2054 = vpop.f32.mrf.mxu0
        %v2055 = vadd.f32 %v1976, %v2054
        %v2056 = vpop.f32.mrf.mxu0
        %2057 = vdwg.mxu0
        %2058 = vmatprep.subr.mxu0 0.0
        %2059 = vmatpush1.msra.mxu0 0.0
        %2060 = vmatprep.subr.mxu0 0.0
        %2061 = vmatpush1.msra.mxu0 0.0
        %2062 = vmatprep.subr.mxu0 0.0
        %2063 = vmatpush1.msra.mxu0 0.0
        %2064 = vmatprep.subr.mxu0 0.0
        %2065 = vmatpush1.msra.mxu0 0.0
        %2066 = vmatprep.subr.mxu0 0.0
        %2067 = vmatpush1.msra.mxu0 0.0
        %2068 = vmatprep.subr.mxu0 0.0
        %2069 = vmatpush1.msra.mxu0 0.0
        %2070 = vmatprep.subr.mxu0 0.0
        %2071 = vmatpush1.msra.mxu0 0.0
        %2072 = vmatprep.subr.mxu0 0.0
        %2073 = vmatpush1.msra.mxu0 0.0
        %2074 = vmatprep.subr.mxu0 0.0
        %2075 = vmatpush1.msra.mxu0 0.0
        %2076 = vmatprep.subr.mxu0 0.0
        %2077 = vmatpush1.msra.mxu0 0.0
        %2078 = vmatprep.subr.mxu0 0.0
        %2079 = vmatpush1.msra.mxu0 0.0
        %2080 = vmatprep.subr.mxu0 0.0
        %2081 = vmatpush1.msra.mxu0 0.0
        %2082 = vmatprep.subr.mxu0 0.0
        %2083 = vmatpush1.msra.mxu0 0.0
        %2084 = vmatprep.subr.mxu0 0.0
        %2085 = vmatpush1.msra.mxu0 0.0
        %2086 = vmatprep.subr.mxu0 0.0
        %v2087 = vand.u32 %v1033, 4294901760
        %2088 = vmatpush1.msra.mxu0 %v2087
        %2089 = vmatprep.subr.mxu0 0.0
        %v2090 = vand.u32 %v1027, 4294901760
        %2091 = vmatpush1.msra.mxu0 %v2090
        %2092 = vmatprep.subr.mxu0 0.0
        %2093 = vmatpush2.msra.mxu0 0.0
        %2094 = vmatprep.subr.mxu0 0.0
        %2095 = vmatpush2.msra.mxu0 0.0
        %2096 = vmatprep.subr.mxu0 0.0
        %2097 = vmatpush2.msra.mxu0 0.0
        %2098 = vmatprep.subr.mxu0 0.0
        %2099 = vmatpush2.msra.mxu0 0.0
        %2100 = vmatprep.subr.mxu0 0.0
        %2101 = vmatpush2.msra.mxu0 0.0
        %2102 = vmatprep.subr.mxu0 0.0
        %2103 = vmatpush2.msra.mxu0 0.0
        %2104 = vmatprep.subr.mxu0 0.0
        %2105 = vmatpush2.msra.mxu0 0.0
        %2106 = vmatprep.subr.mxu0 0.0
        %2107 = vmatpush2.msra.mxu0 0.0
        %2108 = vmatprep.subr.mxu0 0.0
        %2109 = vmatpush2.msra.mxu0 0.0
        %2110 = vmatprep.subr.mxu0 0.0
        %2111 = vmatpush2.msra.mxu0 0.0
        %2112 = vmatprep.subr.mxu0 0.0
        %2113 = vmatpush2.msra.mxu0 0.0
        %2114 = vmatprep.subr.mxu0 0.0
        %2115 = vmatpush2.msra.mxu0 0.0
        %2116 = vmatprep.subr.mxu0 0.0
        %2117 = vmatpush2.msra.mxu0 0.0
        %2118 = vmatprep.subr.mxu0 0.0
        %2119 = vmatpush2.msra.mxu0 0.0
        %2120 = vmatprep.subr.mxu0 0.0
        %2121 = vmatpush2.msra.mxu0 0.0
        %2122 = vmatprep.subr.mxu0 0.0
        %2123 = vmatpush2.msra.mxu0 0.0
        %2124 = vmatprep.mubr.f32.mxu0 0.0
        %v2125 = vand.u32 %v1049, 4294901760
        %v2126 = vsub.f32 %v1049, %v2125
        %v2127 = vand.u32 %v2126, 4294901760
        %v2128 = vsub.f32 %v2126, %v2127
        %v2129 = vand.u32 %v2128, 4294901760
        %2130 = vmatmul.mubr.f32.gmra.mxu0 %v2129
        %v2131 = vpop.f32.mrf.mxu0
        %v2132 = vadd.f32 0.0, %v2131
        %v2133 = vpop.f32.mrf.mxu0
        %2134 = vmatprep.mubr.f32.mxu0 0.0
        %v2135 = vand.u32 %v1052, 4294901760
        %v2136 = vsub.f32 %v1052, %v2135
        %v2137 = vand.u32 %v2136, 4294901760
        %v2138 = vsub.f32 %v2136, %v2137
        %v2139 = vand.u32 %v2138, 4294901760
        %2140 = vmatmul.mubr.f32.gmra.mxu0 %v2139
        %v2141 = vpop.f32.mrf.mxu0
        %v2142 = vadd.f32 0.0, %v2141
        %v2143 = vpop.f32.mrf.mxu0
        %2144 = vdwg.mxu0
        %2145 = vmatprep.subr.mxu0 0.0
        %2146 = vmatpush1.msra.mxu0 0.0
        %2147 = vmatprep.subr.mxu0 0.0
        %2148 = vmatpush1.msra.mxu0 0.0
        %2149 = vmatprep.subr.mxu0 0.0
        %2150 = vmatpush1.msra.mxu0 0.0
        %2151 = vmatprep.subr.mxu0 0.0
        %2152 = vmatpush1.msra.mxu0 0.0
        %2153 = vmatprep.subr.mxu0 0.0
        %2154 = vmatpush1.msra.mxu0 0.0
        %2155 = vmatprep.subr.mxu0 0.0
        %2156 = vmatpush1.msra.mxu0 0.0
        %2157 = vmatprep.subr.mxu0 0.0
        %2158 = vmatpush1.msra.mxu0 0.0
        %2159 = vmatprep.subr.mxu0 0.0
        %2160 = vmatpush1.msra.mxu0 0.0
        %2161 = vmatprep.subr.mxu0 0.0
        %2162 = vmatpush1.msra.mxu0 0.0
        %2163 = vmatprep.subr.mxu0 0.0
        %2164 = vmatpush1.msra.mxu0 0.0
        %2165 = vmatprep.subr.mxu0 0.0
        %2166 = vmatpush1.msra.mxu0 0.0
        %2167 = vmatprep.subr.mxu0 0.0
        %2168 = vmatpush1.msra.mxu0 0.0
        %2169 = vmatprep.subr.mxu0 0.0
        %2170 = vmatpush1.msra.mxu0 0.0
        %2171 = vmatprep.subr.mxu0 0.0
        %2172 = vmatpush1.msra.mxu0 0.0
        %2173 = vmatprep.subr.mxu0 0.0
        %v2174 = vand.u32 %v1033, 4294901760
        %v2175 = vsub.f32 %v1033, %v2174
        %v2176 = vand.u32 %v2175, 4294901760
        %v2177 = vsub.f32 %v2175, %v2176
        %v2178 = vand.u32 %v2177, 4294901760
        %2179 = vmatpush1.msra.mxu0 %v2178
        %2180 = vmatprep.subr.mxu0 0.0
        %v2181 = vand.u32 %v1027, 4294901760
        %v2182 = vsub.f32 %v1027, %v2181
        %v2183 = vand.u32 %v2182, 4294901760
        %v2184 = vsub.f32 %v2182, %v2183
        %v2185 = vand.u32 %v2184, 4294901760
        %2186 = vmatpush1.msra.mxu0 %v2185
        %2187 = vmatprep.subr.mxu0 0.0
        %2188 = vmatpush2.msra.mxu0 0.0
        %2189 = vmatprep.subr.mxu0 0.0
        %2190 = vmatpush2.msra.mxu0 0.0
        %2191 = vmatprep.subr.mxu0 0.0
        %2192 = vmatpush2.msra.mxu0 0.0
        %2193 = vmatprep.subr.mxu0 0.0
        %2194 = vmatpush2.msra.mxu0 0.0
        %2195 = vmatprep.subr.mxu0 0.0
        %2196 = vmatpush2.msra.mxu0 0.0
        %2197 = vmatprep.subr.mxu0 0.0
        %2198 = vmatpush2.msra.mxu0 0.0
        %2199 = vmatprep.subr.mxu0 0.0
        %2200 = vmatpush2.msra.mxu0 0.0
        %2201 = vmatprep.subr.mxu0 0.0
        %2202 = vmatpush2.msra.mxu0 0.0
        %2203 = vmatprep.subr.mxu0 0.0
        %2204 = vmatpush2.msra.mxu0 0.0
        %2205 = vmatprep.subr.mxu0 0.0
        %2206 = vmatpush2.msra.mxu0 0.0
        %2207 = vmatprep.subr.mxu0 0.0
        %2208 = vmatpush2.msra.mxu0 0.0
        %2209 = vmatprep.subr.mxu0 0.0
        %2210 = vmatpush2.msra.mxu0 0.0
        %2211 = vmatprep.subr.mxu0 0.0
        %2212 = vmatpush2.msra.mxu0 0.0
        %2213 = vmatprep.subr.mxu0 0.0
        %2214 = vmatpush2.msra.mxu0 0.0
        %2215 = vmatprep.subr.mxu0 0.0
        %2216 = vmatpush2.msra.mxu0 0.0
        %2217 = vmatprep.subr.mxu0 0.0
        %2218 = vmatpush2.msra.mxu0 0.0
        %2219 = vmatprep.mubr.f32.mxu0 0.0
        %v2220 = vand.u32 %v1049, 4294901760
        %2221 = vmatmul.mubr.f32.gmra.mxu0 %v2220
        %v2222 = vpop.f32.mrf.mxu0
        %v2223 = vadd.f32 %v2132, %v2222
        %v2224 = vpop.f32.mrf.mxu0
        %2225 = vmatprep.mubr.f32.mxu0 0.0
        %v2226 = vand.u32 %v1052, 4294901760
        %2227 = vmatmul.mubr.f32.gmra.mxu0 %v2226
        %v2228 = vpop.f32.mrf.mxu0
        %v2229 = vadd.f32 %v2142, %v2228
        %v2230 = vpop.f32.mrf.mxu0
        %2231 = vdwg.mxu0
        %2232 = vmatprep.subr.mxu0 0.0
        %2233 = vmatpush1.msra.mxu0 0.0
        %2234 = vmatprep.subr.mxu0 0.0
        %2235 = vmatpush1.msra.mxu0 0.0
        %2236 = vmatprep.subr.mxu0 0.0
        %2237 = vmatpush1.msra.mxu0 0.0
        %2238 = vmatprep.subr.mxu0 0.0
        %2239 = vmatpush1.msra.mxu0 0.0
        %2240 = vmatprep.subr.mxu0 0.0
        %2241 = vmatpush1.msra.mxu0 0.0
        %2242 = vmatprep.subr.mxu0 0.0
        %2243 = vmatpush1.msra.mxu0 0.0
        %2244 = vmatprep.subr.mxu0 0.0
        %2245 = vmatpush1.msra.mxu0 0.0
        %2246 = vmatprep.subr.mxu0 0.0
        %2247 = vmatpush1.msra.mxu0 0.0
        %2248 = vmatprep.subr.mxu0 0.0
        %2249 = vmatpush1.msra.mxu0 0.0
        %2250 = vmatprep.subr.mxu0 0.0
        %2251 = vmatpush1.msra.mxu0 0.0
        %2252 = vmatprep.subr.mxu0 0.0
        %2253 = vmatpush1.msra.mxu0 0.0
        %2254 = vmatprep.subr.mxu0 0.0
        %2255 = vmatpush1.msra.mxu0 0.0
        %2256 = vmatprep.subr.mxu0 0.0
        %2257 = vmatpush1.msra.mxu0 0.0
        %2258 = vmatprep.subr.mxu0 0.0
        %2259 = vmatpush1.msra.mxu0 0.0
        %2260 = vmatprep.subr.mxu0 0.0
        %v2261 = vand.u32 %v1033, 4294901760
        %v2262 = vsub.f32 %v1033, %v2261
        %2263 = vmatpush1.msra.mxu0 %v2262
        %2264 = vmatprep.subr.mxu0 0.0
        %v2265 = vand.u32 %v1027, 4294901760
        %v2266 = vsub.f32 %v1027, %v2265
        %2267 = vmatpush1.msra.mxu0 %v2266
        %2268 = vmatprep.subr.mxu0 0.0
        %2269 = vmatpush2.msra.mxu0 0.0
        %2270 = vmatprep.subr.mxu0 0.0
        %2271 = vmatpush2.msra.mxu0 0.0
        %2272 = vmatprep.subr.mxu0 0.0
        %2273 = vmatpush2.msra.mxu0 0.0
        %2274 = vmatprep.subr.mxu0 0.0
        %2275 = vmatpush2.msra.mxu0 0.0
        %2276 = vmatprep.subr.mxu0 0.0
        %2277 = vmatpush2.msra.mxu0 0.0
        %2278 = vmatprep.subr.mxu0 0.0
        %2279 = vmatpush2.msra.mxu0 0.0
        %2280 = vmatprep.subr.mxu0 0.0
        %2281 = vmatpush2.msra.mxu0 0.0
        %2282 = vmatprep.subr.mxu0 0.0
        %2283 = vmatpush2.msra.mxu0 0.0
        %2284 = vmatprep.subr.mxu0 0.0
        %2285 = vmatpush2.msra.mxu0 0.0
        %2286 = vmatprep.subr.mxu0 0.0
        %2287 = vmatpush2.msra.mxu0 0.0
        %2288 = vmatprep.subr.mxu0 0.0
        %2289 = vmatpush2.msra.mxu0 0.0
        %2290 = vmatprep.subr.mxu0 0.0
        %2291 = vmatpush2.msra.mxu0 0.0
        %2292 = vmatprep.subr.mxu0 0.0
        %2293 = vmatpush2.msra.mxu0 0.0
        %2294 = vmatprep.subr.mxu0 0.0
        %2295 = vmatpush2.msra.mxu0 0.0
        %2296 = vmatprep.subr.mxu0 0.0
        %2297 = vmatpush2.msra.mxu0 0.0
        %2298 = vmatprep.subr.mxu0 0.0
        %2299 = vmatpush2.msra.mxu0 0.0
        %2300 = vmatprep.mubr.f32.mxu0 0.0
        %v2301 = vand.u32 %v1049, 4294901760
        %v2302 = vsub.f32 %v1049, %v2301
        %2303 = vmatmul.mubr.f32.gmra.mxu0 %v2302
        %v2304 = vpop.f32.mrf.mxu0
        %v2305 = vadd.f32 %v2223, %v2304
        %v2306 = vpop.f32.mrf.mxu0
        %2307 = vmatprep.mubr.f32.mxu0 0.0
        %v2308 = vand.u32 %v1052, 4294901760
        %v2309 = vsub.f32 %v1052, %v2308
        %2310 = vmatmul.mubr.f32.gmra.mxu0 %v2309
        %v2311 = vpop.f32.mrf.mxu0
        %v2312 = vadd.f32 %v2229, %v2311
        %v2313 = vpop.f32.mrf.mxu0
        %2314 = vdwg.mxu0
        %2315 = vmatprep.subr.mxu0 0.0
        %2316 = vmatpush1.msra.mxu0 0.0
        %2317 = vmatprep.subr.mxu0 0.0
        %2318 = vmatpush1.msra.mxu0 0.0
        %2319 = vmatprep.subr.mxu0 0.0
        %2320 = vmatpush1.msra.mxu0 0.0
        %2321 = vmatprep.subr.mxu0 0.0
        %2322 = vmatpush1.msra.mxu0 0.0
        %2323 = vmatprep.subr.mxu0 0.0
        %2324 = vmatpush1.msra.mxu0 0.0
        %2325 = vmatprep.subr.mxu0 0.0
        %2326 = vmatpush1.msra.mxu0 0.0
        %2327 = vmatprep.subr.mxu0 0.0
        %2328 = vmatpush1.msra.mxu0 0.0
        %2329 = vmatprep.subr.mxu0 0.0
        %2330 = vmatpush1.msra.mxu0 0.0
        %2331 = vmatprep.subr.mxu0 0.0
        %2332 = vmatpush1.msra.mxu0 0.0
        %2333 = vmatprep.subr.mxu0 0.0
        %2334 = vmatpush1.msra.mxu0 0.0
        %2335 = vmatprep.subr.mxu0 0.0
        %2336 = vmatpush1.msra.mxu0 0.0
        %2337 = vmatprep.subr.mxu0 0.0
        %2338 = vmatpush1.msra.mxu0 0.0
        %2339 = vmatprep.subr.mxu0 0.0
        %2340 = vmatpush1.msra.mxu0 0.0
        %2341 = vmatprep.subr.mxu0 0.0
        %2342 = vmatpush1.msra.mxu0 0.0
        %2343 = vmatprep.subr.mxu0 0.0
        %v2344 = vand.u32 %v1033, 4294901760
        %2345 = vmatpush1.msra.mxu0 %v2344
        %2346 = vmatprep.subr.mxu0 0.0
        %v2347 = vand.u32 %v1027, 4294901760
        %2348 = vmatpush1.msra.mxu0 %v2347
        %2349 = vmatprep.subr.mxu0 0.0
        %2350 = vmatpush2.msra.mxu0 0.0
        %2351 = vmatprep.subr.mxu0 0.0
        %2352 = vmatpush2.msra.mxu0 0.0
        %2353 = vmatprep.subr.mxu0 0.0
        %2354 = vmatpush2.msra.mxu0 0.0
        %2355 = vmatprep.subr.mxu0 0.0
        %2356 = vmatpush2.msra.mxu0 0.0
        %2357 = vmatprep.subr.mxu0 0.0
        %2358 = vmatpush2.msra.mxu0 0.0
        %2359 = vmatprep.subr.mxu0 0.0
        %2360 = vmatpush2.msra.mxu0 0.0
        %2361 = vmatprep.subr.mxu0 0.0
        %2362 = vmatpush2.msra.mxu0 0.0
        %2363 = vmatprep.subr.mxu0 0.0
        %2364 = vmatpush2.msra.mxu0 0.0
        %2365 = vmatprep.subr.mxu0 0.0
        %2366 = vmatpush2.msra.mxu0 0.0
        %2367 = vmatprep.subr.mxu0 0.0
        %2368 = vmatpush2.msra.mxu0 0.0
        %2369 = vmatprep.subr.mxu0 0.0
        %2370 = vmatpush2.msra.mxu0 0.0
        %2371 = vmatprep.subr.mxu0 0.0
        %2372 = vmatpush2.msra.mxu0 0.0
        %2373 = vmatprep.subr.mxu0 0.0
        %2374 = vmatpush2.msra.mxu0 0.0
        %2375 = vmatprep.subr.mxu0 0.0
        %2376 = vmatpush2.msra.mxu0 0.0
        %2377 = vmatprep.subr.mxu0 0.0
        %2378 = vmatpush2.msra.mxu0 0.0
        %2379 = vmatprep.subr.mxu0 0.0
        %2380 = vmatpush2.msra.mxu0 0.0
        %2381 = vmatprep.mubr.f32.mxu0 0.0
        %v2382 = vand.u32 %v1049, 4294901760
        %v2383 = vsub.f32 %v1049, %v2382
        %v2384 = vand.u32 %v2383, 4294901760
        %2385 = vmatmul.mubr.f32.gmra.mxu0 %v2384
        %v2386 = vpop.f32.mrf.mxu0
        %v2387 = vadd.f32 %v2305, %v2386
        %v2388 = vpop.f32.mrf.mxu0
        %2389 = vmatprep.mubr.f32.mxu0 0.0
        %v2390 = vand.u32 %v1052, 4294901760
        %v2391 = vsub.f32 %v1052, %v2390
        %v2392 = vand.u32 %v2391, 4294901760
        %2393 = vmatmul.mubr.f32.gmra.mxu0 %v2392
        %v2394 = vpop.f32.mrf.mxu0
        %v2395 = vadd.f32 %v2312, %v2394
        %v2396 = vpop.f32.mrf.mxu0
        %2397 = vdwg.mxu0
        %2398 = vmatprep.subr.mxu0 0.0
        %2399 = vmatpush1.msra.mxu0 0.0
        %2400 = vmatprep.subr.mxu0 0.0
        %2401 = vmatpush1.msra.mxu0 0.0
        %2402 = vmatprep.subr.mxu0 0.0
        %2403 = vmatpush1.msra.mxu0 0.0
        %2404 = vmatprep.subr.mxu0 0.0
        %2405 = vmatpush1.msra.mxu0 0.0
        %2406 = vmatprep.subr.mxu0 0.0
        %2407 = vmatpush1.msra.mxu0 0.0
        %2408 = vmatprep.subr.mxu0 0.0
        %2409 = vmatpush1.msra.mxu0 0.0
        %2410 = vmatprep.subr.mxu0 0.0
        %2411 = vmatpush1.msra.mxu0 0.0
        %2412 = vmatprep.subr.mxu0 0.0
        %2413 = vmatpush1.msra.mxu0 0.0
        %2414 = vmatprep.subr.mxu0 0.0
        %2415 = vmatpush1.msra.mxu0 0.0
        %2416 = vmatprep.subr.mxu0 0.0
        %2417 = vmatpush1.msra.mxu0 0.0
        %2418 = vmatprep.subr.mxu0 0.0
        %2419 = vmatpush1.msra.mxu0 0.0
        %2420 = vmatprep.subr.mxu0 0.0
        %2421 = vmatpush1.msra.mxu0 0.0
        %2422 = vmatprep.subr.mxu0 0.0
        %2423 = vmatpush1.msra.mxu0 0.0
        %2424 = vmatprep.subr.mxu0 0.0
        %2425 = vmatpush1.msra.mxu0 0.0
        %2426 = vmatprep.subr.mxu0 0.0
        %v2427 = vand.u32 %v1033, 4294901760
        %v2428 = vsub.f32 %v1033, %v2427
        %v2429 = vand.u32 %v2428, 4294901760
        %2430 = vmatpush1.msra.mxu0 %v2429
        %2431 = vmatprep.subr.mxu0 0.0
        %v2432 = vand.u32 %v1027, 4294901760
        %v2433 = vsub.f32 %v1027, %v2432
        %v2434 = vand.u32 %v2433, 4294901760
        %2435 = vmatpush1.msra.mxu0 %v2434
        %2436 = vmatprep.subr.mxu0 0.0
        %2437 = vmatpush2.msra.mxu0 0.0
        %2438 = vmatprep.subr.mxu0 0.0
        %2439 = vmatpush2.msra.mxu0 0.0
        %2440 = vmatprep.subr.mxu0 0.0
        %2441 = vmatpush2.msra.mxu0 0.0
        %2442 = vmatprep.subr.mxu0 0.0
        %2443 = vmatpush2.msra.mxu0 0.0
        %2444 = vmatprep.subr.mxu0 0.0
        %2445 = vmatpush2.msra.mxu0 0.0
        %2446 = vmatprep.subr.mxu0 0.0
        %2447 = vmatpush2.msra.mxu0 0.0
        %2448 = vmatprep.subr.mxu0 0.0
        %2449 = vmatpush2.msra.mxu0 0.0
        %2450 = vmatprep.subr.mxu0 0.0
        %2451 = vmatpush2.msra.mxu0 0.0
        %2452 = vmatprep.subr.mxu0 0.0
        %2453 = vmatpush2.msra.mxu0 0.0
        %2454 = vmatprep.subr.mxu0 0.0
        %2455 = vmatpush2.msra.mxu0 0.0
        %2456 = vmatprep.subr.mxu0 0.0
        %2457 = vmatpush2.msra.mxu0 0.0
        %2458 = vmatprep.subr.mxu0 0.0
        %2459 = vmatpush2.msra.mxu0 0.0
        %2460 = vmatprep.subr.mxu0 0.0
        %2461 = vmatpush2.msra.mxu0 0.0
        %2462 = vmatprep.subr.mxu0 0.0
        %2463 = vmatpush2.msra.mxu0 0.0
        %2464 = vmatprep.subr.mxu0 0.0
        %2465 = vmatpush2.msra.mxu0 0.0
        %2466 = vmatprep.subr.mxu0 0.0
        %2467 = vmatpush2.msra.mxu0 0.0
        %2468 = vmatprep.mubr.f32.mxu0 0.0
        %v2469 = vand.u32 %v1049, 4294901760
        %2470 = vmatmul.mubr.f32.gmra.mxu0 %v2469
        %v2471 = vpop.f32.mrf.mxu0
        %v2472 = vadd.f32 %v2387, %v2471
        %v2473 = vpop.f32.mrf.mxu0
        %2474 = vmatprep.mubr.f32.mxu0 0.0
        %v2475 = vand.u32 %v1052, 4294901760
        %2476 = vmatmul.mubr.f32.gmra.mxu0 %v2475
        %v2477 = vpop.f32.mrf.mxu0
        %v2478 = vadd.f32 %v2395, %v2477
        %v2479 = vpop.f32.mrf.mxu0
        %2480 = vdwg.mxu0
        %2481 = vmatprep.subr.mxu0 0.0
        %2482 = vmatpush1.msra.mxu0 0.0
        %2483 = vmatprep.subr.mxu0 0.0
        %2484 = vmatpush1.msra.mxu0 0.0
        %2485 = vmatprep.subr.mxu0 0.0
        %2486 = vmatpush1.msra.mxu0 0.0
        %2487 = vmatprep.subr.mxu0 0.0
        %2488 = vmatpush1.msra.mxu0 0.0
        %2489 = vmatprep.subr.mxu0 0.0
        %2490 = vmatpush1.msra.mxu0 0.0
        %2491 = vmatprep.subr.mxu0 0.0
        %2492 = vmatpush1.msra.mxu0 0.0
        %2493 = vmatprep.subr.mxu0 0.0
        %2494 = vmatpush1.msra.mxu0 0.0
        %2495 = vmatprep.subr.mxu0 0.0
        %2496 = vmatpush1.msra.mxu0 0.0
        %2497 = vmatprep.subr.mxu0 0.0
        %2498 = vmatpush1.msra.mxu0 0.0
        %2499 = vmatprep.subr.mxu0 0.0
        %2500 = vmatpush1.msra.mxu0 0.0
        %2501 = vmatprep.subr.mxu0 0.0
        %2502 = vmatpush1.msra.mxu0 0.0
        %2503 = vmatprep.subr.mxu0 0.0
        %2504 = vmatpush1.msra.mxu0 0.0
        %2505 = vmatprep.subr.mxu0 0.0
        %2506 = vmatpush1.msra.mxu0 0.0
        %2507 = vmatprep.subr.mxu0 0.0
        %2508 = vmatpush1.msra.mxu0 0.0
        %2509 = vmatprep.subr.mxu0 0.0
        %v2510 = vand.u32 %v1033, 4294901760
        %2511 = vmatpush1.msra.mxu0 %v2510
        %2512 = vmatprep.subr.mxu0 0.0
        %v2513 = vand.u32 %v1027, 4294901760
        %2514 = vmatpush1.msra.mxu0 %v2513
        %2515 = vmatprep.subr.mxu0 0.0
        %2516 = vmatpush2.msra.mxu0 0.0
        %2517 = vmatprep.subr.mxu0 0.0
        %2518 = vmatpush2.msra.mxu0 0.0
        %2519 = vmatprep.subr.mxu0 0.0
        %2520 = vmatpush2.msra.mxu0 0.0
        %2521 = vmatprep.subr.mxu0 0.0
        %2522 = vmatpush2.msra.mxu0 0.0
        %2523 = vmatprep.subr.mxu0 0.0
        %2524 = vmatpush2.msra.mxu0 0.0
        %2525 = vmatprep.subr.mxu0 0.0
        %2526 = vmatpush2.msra.mxu0 0.0
        %2527 = vmatprep.subr.mxu0 0.0
        %2528 = vmatpush2.msra.mxu0 0.0
        %2529 = vmatprep.subr.mxu0 0.0
        %2530 = vmatpush2.msra.mxu0 0.0
        %2531 = vmatprep.subr.mxu0 0.0
        %2532 = vmatpush2.msra.mxu0 0.0
        %2533 = vmatprep.subr.mxu0 0.0
        %2534 = vmatpush2.msra.mxu0 0.0
        %2535 = vmatprep.subr.mxu0 0.0
        %2536 = vmatpush2.msra.mxu0 0.0
        %2537 = vmatprep.subr.mxu0 0.0
        %2538 = vmatpush2.msra.mxu0 0.0
        %2539 = vmatprep.subr.mxu0 0.0
        %2540 = vmatpush2.msra.mxu0 0.0
        %2541 = vmatprep.subr.mxu0 0.0
        %2542 = vmatpush2.msra.mxu0 0.0
        %2543 = vmatprep.subr.mxu0 0.0
        %2544 = vmatpush2.msra.mxu0 0.0
        %2545 = vmatprep.subr.mxu0 0.0
        %2546 = vmatpush2.msra.mxu0 0.0
        %2547 = vmatprep.mubr.f32.mxu0 0.0
        %v2548 = vand.u32 %v1049, 4294901760
        %2549 = vmatmul.mubr.f32.gmra.mxu0 %v2548
        %v2550 = vpop.f32.mrf.mxu0
        %v2551 = vadd.f32 %v2472, %v2550
        %v2552 = vpop.f32.mrf.mxu0
        %2553 = vmatprep.mubr.f32.mxu0 0.0
        %v2554 = vand.u32 %v1052, 4294901760
        %2555 = vmatmul.mubr.f32.gmra.mxu0 %v2554
        %v2556 = vpop.f32.mrf.mxu0
        %v2557 = vadd.f32 %v2478, %v2556
        %v2558 = vpop.f32.mrf.mxu0
        %2559 = vdwg.mxu0
        %2560 = vmatprep.subr.mxu0 0.0
        %2561 = vmatpush1.msra.mxu0 0.0
        %2562 = vmatprep.subr.mxu0 0.0
        %2563 = vmatpush1.msra.mxu0 0.0
        %2564 = vmatprep.subr.mxu0 0.0
        %2565 = vmatpush1.msra.mxu0 0.0
        %2566 = vmatprep.subr.mxu0 0.0
        %2567 = vmatpush1.msra.mxu0 0.0
        %2568 = vmatprep.subr.mxu0 0.0
        %2569 = vmatpush1.msra.mxu0 0.0
        %2570 = vmatprep.subr.mxu0 0.0
        %2571 = vmatpush1.msra.mxu0 0.0
        %2572 = vmatprep.subr.mxu0 0.0
        %2573 = vmatpush1.msra.mxu0 0.0
        %2574 = vmatprep.subr.mxu0 0.0
        %2575 = vmatpush1.msra.mxu0 0.0
        %2576 = vmatprep.subr.mxu0 0.0
        %2577 = vmatpush1.msra.mxu0 0.0
        %2578 = vmatprep.subr.mxu0 0.0
        %2579 = vmatpush1.msra.mxu0 0.0
        %2580 = vmatprep.subr.mxu0 0.0
        %2581 = vmatpush1.msra.mxu0 0.0
        %2582 = vmatprep.subr.mxu0 0.0
        %2583 = vmatpush1.msra.mxu0 0.0
        %2584 = vmatprep.subr.mxu0 0.0
        %2585 = vmatpush1.msra.mxu0 0.0
        %2586 = vmatprep.subr.mxu0 0.0
        %2587 = vmatpush1.msra.mxu0 0.0
        %2588 = vmatprep.subr.mxu0 0.0
        %v2589 = vand.u32 %v1045, 4294901760
        %2590 = vmatpush1.msra.mxu0 %v2589
        %2591 = vmatprep.subr.mxu0 0.0
        %v2592 = vand.u32 %v1039, 4294901760
        %2593 = vmatpush1.msra.mxu0 %v2592
        %2594 = vmatprep.subr.mxu0 0.0
        %2595 = vmatpush2.msra.mxu0 0.0
        %2596 = vmatprep.subr.mxu0 0.0
        %2597 = vmatpush2.msra.mxu0 0.0
        %2598 = vmatprep.subr.mxu0 0.0
        %2599 = vmatpush2.msra.mxu0 0.0
        %2600 = vmatprep.subr.mxu0 0.0
        %2601 = vmatpush2.msra.mxu0 0.0
        %2602 = vmatprep.subr.mxu0 0.0
        %2603 = vmatpush2.msra.mxu0 0.0
        %2604 = vmatprep.subr.mxu0 0.0
        %2605 = vmatpush2.msra.mxu0 0.0
        %2606 = vmatprep.subr.mxu0 0.0
        %2607 = vmatpush2.msra.mxu0 0.0
        %2608 = vmatprep.subr.mxu0 0.0
        %2609 = vmatpush2.msra.mxu0 0.0
        %2610 = vmatprep.subr.mxu0 0.0
        %2611 = vmatpush2.msra.mxu0 0.0
        %2612 = vmatprep.subr.mxu0 0.0
        %2613 = vmatpush2.msra.mxu0 0.0
        %2614 = vmatprep.subr.mxu0 0.0
        %2615 = vmatpush2.msra.mxu0 0.0
        %2616 = vmatprep.subr.mxu0 0.0
        %2617 = vmatpush2.msra.mxu0 0.0
        %2618 = vmatprep.subr.mxu0 0.0
        %2619 = vmatpush2.msra.mxu0 0.0
        %2620 = vmatprep.subr.mxu0 0.0
        %2621 = vmatpush2.msra.mxu0 0.0
        %2622 = vmatprep.subr.mxu0 0.0
        %2623 = vmatpush2.msra.mxu0 0.0
        %2624 = vmatprep.subr.mxu0 0.0
        %2625 = vmatpush2.msra.mxu0 0.0
        %2626 = vmatprep.mubr.f32.mxu0 0.0
        %v2627 = vand.u32 %v1049, 4294901760
        %v2628 = vsub.f32 %v1049, %v2627
        %v2629 = vand.u32 %v2628, 4294901760
        %v2630 = vsub.f32 %v2628, %v2629
        %v2631 = vand.u32 %v2630, 4294901760
        %2632 = vmatmul.mubr.f32.gmra.mxu0 %v2631
        %v2633 = vpop.f32.mrf.mxu0
        %v2634 = vadd.f32 0.0, %v2633
        %v2635 = vpop.f32.mrf.mxu0
        %2636 = vmatprep.mubr.f32.mxu0 0.0
        %v2637 = vand.u32 %v1052, 4294901760
        %v2638 = vsub.f32 %v1052, %v2637
        %v2639 = vand.u32 %v2638, 4294901760
        %v2640 = vsub.f32 %v2638, %v2639
        %v2641 = vand.u32 %v2640, 4294901760
        %2642 = vmatmul.mubr.f32.gmra.mxu0 %v2641
        %v2643 = vpop.f32.mrf.mxu0
        %v2644 = vadd.f32 0.0, %v2643
        %v2645 = vpop.f32.mrf.mxu0
        %2646 = vdwg.mxu0
        %2647 = vmatprep.subr.mxu0 0.0
        %2648 = vmatpush1.msra.mxu0 0.0
        %2649 = vmatprep.subr.mxu0 0.0
        %2650 = vmatpush1.msra.mxu0 0.0
        %2651 = vmatprep.subr.mxu0 0.0
        %2652 = vmatpush1.msra.mxu0 0.0
        %2653 = vmatprep.subr.mxu0 0.0
        %2654 = vmatpush1.msra.mxu0 0.0
        %2655 = vmatprep.subr.mxu0 0.0
        %2656 = vmatpush1.msra.mxu0 0.0
        %2657 = vmatprep.subr.mxu0 0.0
        %2658 = vmatpush1.msra.mxu0 0.0
        %2659 = vmatprep.subr.mxu0 0.0
        %2660 = vmatpush1.msra.mxu0 0.0
        %2661 = vmatprep.subr.mxu0 0.0
        %2662 = vmatpush1.msra.mxu0 0.0
        %2663 = vmatprep.subr.mxu0 0.0
        %2664 = vmatpush1.msra.mxu0 0.0
        %2665 = vmatprep.subr.mxu0 0.0
        %2666 = vmatpush1.msra.mxu0 0.0
        %2667 = vmatprep.subr.mxu0 0.0
        %2668 = vmatpush1.msra.mxu0 0.0
        %2669 = vmatprep.subr.mxu0 0.0
        %2670 = vmatpush1.msra.mxu0 0.0
        %2671 = vmatprep.subr.mxu0 0.0
        %2672 = vmatpush1.msra.mxu0 0.0
        %2673 = vmatprep.subr.mxu0 0.0
        %2674 = vmatpush1.msra.mxu0 0.0
        %2675 = vmatprep.subr.mxu0 0.0
        %v2676 = vand.u32 %v1045, 4294901760
        %v2677 = vsub.f32 %v1045, %v2676
        %v2678 = vand.u32 %v2677, 4294901760
        %v2679 = vsub.f32 %v2677, %v2678
        %v2680 = vand.u32 %v2679, 4294901760
        %2681 = vmatpush1.msra.mxu0 %v2680
        %2682 = vmatprep.subr.mxu0 0.0
        %v2683 = vand.u32 %v1039, 4294901760
        %v2684 = vsub.f32 %v1039, %v2683
        %v2685 = vand.u32 %v2684, 4294901760
        %v2686 = vsub.f32 %v2684, %v2685
        %v2687 = vand.u32 %v2686, 4294901760
        %2688 = vmatpush1.msra.mxu0 %v2687
        %2689 = vmatprep.subr.mxu0 0.0
        %2690 = vmatpush2.msra.mxu0 0.0
        %2691 = vmatprep.subr.mxu0 0.0
        %2692 = vmatpush2.msra.mxu0 0.0
        %2693 = vmatprep.subr.mxu0 0.0
        %2694 = vmatpush2.msra.mxu0 0.0
        %2695 = vmatprep.subr.mxu0 0.0
        %2696 = vmatpush2.msra.mxu0 0.0
        %2697 = vmatprep.subr.mxu0 0.0
        %2698 = vmatpush2.msra.mxu0 0.0
        %2699 = vmatprep.subr.mxu0 0.0
        %2700 = vmatpush2.msra.mxu0 0.0
        %2701 = vmatprep.subr.mxu0 0.0
        %2702 = vmatpush2.msra.mxu0 0.0
        %2703 = vmatprep.subr.mxu0 0.0
        %2704 = vmatpush2.msra.mxu0 0.0
        %2705 = vmatprep.subr.mxu0 0.0
        %2706 = vmatpush2.msra.mxu0 0.0
        %2707 = vmatprep.subr.mxu0 0.0
        %2708 = vmatpush2.msra.mxu0 0.0
        %2709 = vmatprep.subr.mxu0 0.0
        %2710 = vmatpush2.msra.mxu0 0.0
        %2711 = vmatprep.subr.mxu0 0.0
        %2712 = vmatpush2.msra.mxu0 0.0
        %2713 = vmatprep.subr.mxu0 0.0
        %2714 = vmatpush2.msra.mxu0 0.0
        %2715 = vmatprep.subr.mxu0 0.0
        %2716 = vmatpush2.msra.mxu0 0.0
        %2717 = vmatprep.subr.mxu0 0.0
        %2718 = vmatpush2.msra.mxu0 0.0
        %2719 = vmatprep.subr.mxu0 0.0
        %2720 = vmatpush2.msra.mxu0 0.0
        %2721 = vmatprep.mubr.f32.mxu0 0.0
        %v2722 = vand.u32 %v1049, 4294901760
        %2723 = vmatmul.mubr.f32.gmra.mxu0 %v2722
        %v2724 = vpop.f32.mrf.mxu0
        %v2725 = vadd.f32 %v2634, %v2724
        %v2726 = vpop.f32.mrf.mxu0
        %2727 = vmatprep.mubr.f32.mxu0 0.0
        %v2728 = vand.u32 %v1052, 4294901760
        %2729 = vmatmul.mubr.f32.gmra.mxu0 %v2728
        %v2730 = vpop.f32.mrf.mxu0
        %v2731 = vadd.f32 %v2644, %v2730
        %v2732 = vpop.f32.mrf.mxu0
        %2733 = vdwg.mxu0
        %2734 = vmatprep.subr.mxu0 0.0
        %2735 = vmatpush1.msra.mxu0 0.0
        %2736 = vmatprep.subr.mxu0 0.0
        %2737 = vmatpush1.msra.mxu0 0.0
        %2738 = vmatprep.subr.mxu0 0.0
        %2739 = vmatpush1.msra.mxu0 0.0
        %2740 = vmatprep.subr.mxu0 0.0
        %2741 = vmatpush1.msra.mxu0 0.0
        %2742 = vmatprep.subr.mxu0 0.0
        %2743 = vmatpush1.msra.mxu0 0.0
        %2744 = vmatprep.subr.mxu0 0.0
        %2745 = vmatpush1.msra.mxu0 0.0
        %2746 = vmatprep.subr.mxu0 0.0
        %2747 = vmatpush1.msra.mxu0 0.0
        %2748 = vmatprep.subr.mxu0 0.0
        %2749 = vmatpush1.msra.mxu0 0.0
        %2750 = vmatprep.subr.mxu0 0.0
        %2751 = vmatpush1.msra.mxu0 0.0
        %2752 = vmatprep.subr.mxu0 0.0
        %2753 = vmatpush1.msra.mxu0 0.0
        %2754 = vmatprep.subr.mxu0 0.0
        %2755 = vmatpush1.msra.mxu0 0.0
        %2756 = vmatprep.subr.mxu0 0.0
        %2757 = vmatpush1.msra.mxu0 0.0
        %2758 = vmatprep.subr.mxu0 0.0
        %2759 = vmatpush1.msra.mxu0 0.0
        %2760 = vmatprep.subr.mxu0 0.0
        %2761 = vmatpush1.msra.mxu0 0.0
        %2762 = vmatprep.subr.mxu0 0.0
        %v2763 = vand.u32 %v1045, 4294901760
        %v2764 = vsub.f32 %v1045, %v2763
        %2765 = vmatpush1.msra.mxu0 %v2764
        %2766 = vmatprep.subr.mxu0 0.0
        %v2767 = vand.u32 %v1039, 4294901760
        %v2768 = vsub.f32 %v1039, %v2767
        %2769 = vmatpush1.msra.mxu0 %v2768
        %2770 = vmatprep.subr.mxu0 0.0
        %2771 = vmatpush2.msra.mxu0 0.0
        %2772 = vmatprep.subr.mxu0 0.0
        %2773 = vmatpush2.msra.mxu0 0.0
        %2774 = vmatprep.subr.mxu0 0.0
        %2775 = vmatpush2.msra.mxu0 0.0
        %2776 = vmatprep.subr.mxu0 0.0
        %2777 = vmatpush2.msra.mxu0 0.0
        %2778 = vmatprep.subr.mxu0 0.0
        %2779 = vmatpush2.msra.mxu0 0.0
        %2780 = vmatprep.subr.mxu0 0.0
        %2781 = vmatpush2.msra.mxu0 0.0
        %2782 = vmatprep.subr.mxu0 0.0
        %2783 = vmatpush2.msra.mxu0 0.0
        %2784 = vmatprep.subr.mxu0 0.0
        %2785 = vmatpush2.msra.mxu0 0.0
        %2786 = vmatprep.subr.mxu0 0.0
        %2787 = vmatpush2.msra.mxu0 0.0
        %2788 = vmatprep.subr.mxu0 0.0
        %2789 = vmatpush2.msra.mxu0 0.0
        %2790 = vmatprep.subr.mxu0 0.0
        %2791 = vmatpush2.msra.mxu0 0.0
        %2792 = vmatprep.subr.mxu0 0.0
        %2793 = vmatpush2.msra.mxu0 0.0
        %2794 = vmatprep.subr.mxu0 0.0
        %2795 = vmatpush2.msra.mxu0 0.0
        %2796 = vmatprep.subr.mxu0 0.0
        %2797 = vmatpush2.msra.mxu0 0.0
        %2798 = vmatprep.subr.mxu0 0.0
        %2799 = vmatpush2.msra.mxu0 0.0
        %2800 = vmatprep.subr.mxu0 0.0
        %2801 = vmatpush2.msra.mxu0 0.0
        %2802 = vmatprep.mubr.f32.mxu0 0.0
        %v2803 = vand.u32 %v1049, 4294901760
        %v2804 = vsub.f32 %v1049, %v2803
        %2805 = vmatmul.mubr.f32.gmra.mxu0 %v2804
        %v2806 = vpop.f32.mrf.mxu0
        %v2807 = vadd.f32 %v2725, %v2806
        %v2808 = vpop.f32.mrf.mxu0
        %2809 = vmatprep.mubr.f32.mxu0 0.0
        %v2810 = vand.u32 %v1052, 4294901760
        %v2811 = vsub.f32 %v1052, %v2810
        %2812 = vmatmul.mubr.f32.gmra.mxu0 %v2811
        %v2813 = vpop.f32.mrf.mxu0
        %v2814 = vadd.f32 %v2731, %v2813
        %v2815 = vpop.f32.mrf.mxu0
        %2816 = vdwg.mxu0
        %2817 = vmatprep.subr.mxu0 0.0
        %2818 = vmatpush1.msra.mxu0 0.0
        %2819 = vmatprep.subr.mxu0 0.0
        %2820 = vmatpush1.msra.mxu0 0.0
        %2821 = vmatprep.subr.mxu0 0.0
        %2822 = vmatpush1.msra.mxu0 0.0
        %2823 = vmatprep.subr.mxu0 0.0
        %2824 = vmatpush1.msra.mxu0 0.0
        %2825 = vmatprep.subr.mxu0 0.0
        %2826 = vmatpush1.msra.mxu0 0.0
        %2827 = vmatprep.subr.mxu0 0.0
        %2828 = vmatpush1.msra.mxu0 0.0
        %2829 = vmatprep.subr.mxu0 0.0
        %2830 = vmatpush1.msra.mxu0 0.0
        %2831 = vmatprep.subr.mxu0 0.0
        %2832 = vmatpush1.msra.mxu0 0.0
        %2833 = vmatprep.subr.mxu0 0.0
        %2834 = vmatpush1.msra.mxu0 0.0
        %2835 = vmatprep.subr.mxu0 0.0
        %2836 = vmatpush1.msra.mxu0 0.0
        %2837 = vmatprep.subr.mxu0 0.0
        %2838 = vmatpush1.msra.mxu0 0.0
        %2839 = vmatprep.subr.mxu0 0.0
        %2840 = vmatpush1.msra.mxu0 0.0
        %2841 = vmatprep.subr.mxu0 0.0
        %2842 = vmatpush1.msra.mxu0 0.0
        %2843 = vmatprep.subr.mxu0 0.0
        %2844 = vmatpush1.msra.mxu0 0.0
        %2845 = vmatprep.subr.mxu0 0.0
        %v2846 = vand.u32 %v1045, 4294901760
        %2847 = vmatpush1.msra.mxu0 %v2846
        %2848 = vmatprep.subr.mxu0 0.0
        %v2849 = vand.u32 %v1039, 4294901760
        %2850 = vmatpush1.msra.mxu0 %v2849
        %2851 = vmatprep.subr.mxu0 0.0
        %2852 = vmatpush2.msra.mxu0 0.0
        %2853 = vmatprep.subr.mxu0 0.0
        %2854 = vmatpush2.msra.mxu0 0.0
        %2855 = vmatprep.subr.mxu0 0.0
        %2856 = vmatpush2.msra.mxu0 0.0
        %2857 = vmatprep.subr.mxu0 0.0
        %2858 = vmatpush2.msra.mxu0 0.0
        %2859 = vmatprep.subr.mxu0 0.0
        %2860 = vmatpush2.msra.mxu0 0.0
        %2861 = vmatprep.subr.mxu0 0.0
        %2862 = vmatpush2.msra.mxu0 0.0
        %2863 = vmatprep.subr.mxu0 0.0
        %2864 = vmatpush2.msra.mxu0 0.0
        %2865 = vmatprep.subr.mxu0 0.0
        %2866 = vmatpush2.msra.mxu0 0.0
        %2867 = vmatprep.subr.mxu0 0.0
        %2868 = vmatpush2.msra.mxu0 0.0
        %2869 = vmatprep.subr.mxu0 0.0
        %2870 = vmatpush2.msra.mxu0 0.0
        %2871 = vmatprep.subr.mxu0 0.0
        %2872 = vmatpush2.msra.mxu0 0.0
        %2873 = vmatprep.subr.mxu0 0.0
        %2874 = vmatpush2.msra.mxu0 0.0
        %2875 = vmatprep.subr.mxu0 0.0
        %2876 = vmatpush2.msra.mxu0 0.0
        %2877 = vmatprep.subr.mxu0 0.0
        %2878 = vmatpush2.msra.mxu0 0.0
        %2879 = vmatprep.subr.mxu0 0.0
        %2880 = vmatpush2.msra.mxu0 0.0
        %2881 = vmatprep.subr.mxu0 0.0
        %2882 = vmatpush2.msra.mxu0 0.0
        %2883 = vmatprep.mubr.f32.mxu0 0.0
        %v2884 = vand.u32 %v1049, 4294901760
        %v2885 = vsub.f32 %v1049, %v2884
        %v2886 = vand.u32 %v2885, 4294901760
        %2887 = vmatmul.mubr.f32.gmra.mxu0 %v2886
        %v2888 = vpop.f32.mrf.mxu0
        %v2889 = vadd.f32 %v2807, %v2888
        %v2890 = vpop.f32.mrf.mxu0
        %2891 = vmatprep.mubr.f32.mxu0 0.0
        %v2892 = vand.u32 %v1052, 4294901760
        %v2893 = vsub.f32 %v1052, %v2892
        %v2894 = vand.u32 %v2893, 4294901760
        %2895 = vmatmul.mubr.f32.gmra.mxu0 %v2894
        %v2896 = vpop.f32.mrf.mxu0
        %v2897 = vadd.f32 %v2814, %v2896
        %v2898 = vpop.f32.mrf.mxu0
        %2899 = vdwg.mxu0
        %2900 = vmatprep.subr.mxu0 0.0
        %2901 = vmatpush1.msra.mxu0 0.0
        %2902 = vmatprep.subr.mxu0 0.0
        %2903 = vmatpush1.msra.mxu0 0.0
        %2904 = vmatprep.subr.mxu0 0.0
        %2905 = vmatpush1.msra.mxu0 0.0
        %2906 = vmatprep.subr.mxu0 0.0
        %2907 = vmatpush1.msra.mxu0 0.0
        %2908 = vmatprep.subr.mxu0 0.0
        %2909 = vmatpush1.msra.mxu0 0.0
        %2910 = vmatprep.subr.mxu0 0.0
        %2911 = vmatpush1.msra.mxu0 0.0
        %2912 = vmatprep.subr.mxu0 0.0
        %2913 = vmatpush1.msra.mxu0 0.0
        %2914 = vmatprep.subr.mxu0 0.0
        %2915 = vmatpush1.msra.mxu0 0.0
        %2916 = vmatprep.subr.mxu0 0.0
        %2917 = vmatpush1.msra.mxu0 0.0
        %2918 = vmatprep.subr.mxu0 0.0
        %2919 = vmatpush1.msra.mxu0 0.0
        %2920 = vmatprep.subr.mxu0 0.0
        %2921 = vmatpush1.msra.mxu0 0.0
        %2922 = vmatprep.subr.mxu0 0.0
        %2923 = vmatpush1.msra.mxu0 0.0
        %2924 = vmatprep.subr.mxu0 0.0
        %2925 = vmatpush1.msra.mxu0 0.0
        %2926 = vmatprep.subr.mxu0 0.0
        %2927 = vmatpush1.msra.mxu0 0.0
        %2928 = vmatprep.subr.mxu0 0.0
        %v2929 = vand.u32 %v1045, 4294901760
        %v2930 = vsub.f32 %v1045, %v2929
        %v2931 = vand.u32 %v2930, 4294901760
        %2932 = vmatpush1.msra.mxu0 %v2931
        %2933 = vmatprep.subr.mxu0 0.0
        %v2934 = vand.u32 %v1039, 4294901760
        %v2935 = vsub.f32 %v1039, %v2934
        %v2936 = vand.u32 %v2935, 4294901760
        %2937 = vmatpush1.msra.mxu0 %v2936
        %2938 = vmatprep.subr.mxu0 0.0
        %2939 = vmatpush2.msra.mxu0 0.0
        %2940 = vmatprep.subr.mxu0 0.0
        %2941 = vmatpush2.msra.mxu0 0.0
        %2942 = vmatprep.subr.mxu0 0.0
        %2943 = vmatpush2.msra.mxu0 0.0
        %2944 = vmatprep.subr.mxu0 0.0
        %2945 = vmatpush2.msra.mxu0 0.0
        %2946 = vmatprep.subr.mxu0 0.0
        %2947 = vmatpush2.msra.mxu0 0.0
        %2948 = vmatprep.subr.mxu0 0.0
        %2949 = vmatpush2.msra.mxu0 0.0
        %2950 = vmatprep.subr.mxu0 0.0
        %2951 = vmatpush2.msra.mxu0 0.0
        %2952 = vmatprep.subr.mxu0 0.0
        %2953 = vmatpush2.msra.mxu0 0.0
        %2954 = vmatprep.subr.mxu0 0.0
        %2955 = vmatpush2.msra.mxu0 0.0
        %2956 = vmatprep.subr.mxu0 0.0
        %2957 = vmatpush2.msra.mxu0 0.0
        %2958 = vmatprep.subr.mxu0 0.0
        %2959 = vmatpush2.msra.mxu0 0.0
        %2960 = vmatprep.subr.mxu0 0.0
        %2961 = vmatpush2.msra.mxu0 0.0
        %2962 = vmatprep.subr.mxu0 0.0
        %2963 = vmatpush2.msra.mxu0 0.0
        %2964 = vmatprep.subr.mxu0 0.0
        %2965 = vmatpush2.msra.mxu0 0.0
        %2966 = vmatprep.subr.mxu0 0.0
        %2967 = vmatpush2.msra.mxu0 0.0
        %2968 = vmatprep.subr.mxu0 0.0
        %2969 = vmatpush2.msra.mxu0 0.0
        %2970 = vmatprep.mubr.f32.mxu0 0.0
        %v2971 = vand.u32 %v1049, 4294901760
        %2972 = vmatmul.mubr.f32.gmra.mxu0 %v2971
        %v2973 = vpop.f32.mrf.mxu0
        %v2974 = vadd.f32 %v2889, %v2973
        %v2975 = vpop.f32.mrf.mxu0
        %2976 = vmatprep.mubr.f32.mxu0 0.0
        %v2977 = vand.u32 %v1052, 4294901760
        %2978 = vmatmul.mubr.f32.gmra.mxu0 %v2977
        %v2979 = vpop.f32.mrf.mxu0
        %v2980 = vadd.f32 %v2897, %v2979
        %v2981 = vpop.f32.mrf.mxu0
        %2982 = vdwg.mxu0
        %2983 = vmatprep.subr.mxu0 0.0
        %2984 = vmatpush1.msra.mxu0 0.0
        %2985 = vmatprep.subr.mxu0 0.0
        %2986 = vmatpush1.msra.mxu0 0.0
        %2987 = vmatprep.subr.mxu0 0.0
        %2988 = vmatpush1.msra.mxu0 0.0
        %2989 = vmatprep.subr.mxu0 0.0
        %2990 = vmatpush1.msra.mxu0 0.0
        %2991 = vmatprep.subr.mxu0 0.0
        %2992 = vmatpush1.msra.mxu0 0.0
        %2993 = vmatprep.subr.mxu0 0.0
        %2994 = vmatpush1.msra.mxu0 0.0
        %2995 = vmatprep.subr.mxu0 0.0
        %2996 = vmatpush1.msra.mxu0 0.0
        %2997 = vmatprep.subr.mxu0 0.0
        %2998 = vmatpush1.msra.mxu0 0.0
        %2999 = vmatprep.subr.mxu0 0.0
        %3000 = vmatpush1.msra.mxu0 0.0
        %3001 = vmatprep.subr.mxu0 0.0
        %3002 = vmatpush1.msra.mxu0 0.0
        %3003 = vmatprep.subr.mxu0 0.0
        %3004 = vmatpush1.msra.mxu0 0.0
        %3005 = vmatprep.subr.mxu0 0.0
        %3006 = vmatpush1.msra.mxu0 0.0
        %3007 = vmatprep.subr.mxu0 0.0
        %3008 = vmatpush1.msra.mxu0 0.0
        %3009 = vmatprep.subr.mxu0 0.0
        %3010 = vmatpush1.msra.mxu0 0.0
        %3011 = vmatprep.subr.mxu0 0.0
        %v3012 = vand.u32 %v1045, 4294901760
        %3013 = vmatpush1.msra.mxu0 %v3012
        %3014 = vmatprep.subr.mxu0 0.0
        %v3015 = vand.u32 %v1039, 4294901760
        %3016 = vmatpush1.msra.mxu0 %v3015
        %3017 = vmatprep.subr.mxu0 0.0
        %3018 = vmatpush2.msra.mxu0 0.0
        %3019 = vmatprep.subr.mxu0 0.0
        %3020 = vmatpush2.msra.mxu0 0.0
        %3021 = vmatprep.subr.mxu0 0.0
        %3022 = vmatpush2.msra.mxu0 0.0
        %3023 = vmatprep.subr.mxu0 0.0
        %3024 = vmatpush2.msra.mxu0 0.0
        %3025 = vmatprep.subr.mxu0 0.0
        %3026 = vmatpush2.msra.mxu0 0.0
        %3027 = vmatprep.subr.mxu0 0.0
        %3028 = vmatpush2.msra.mxu0 0.0
        %3029 = vmatprep.subr.mxu0 0.0
        %3030 = vmatpush2.msra.mxu0 0.0
        %3031 = vmatprep.subr.mxu0 0.0
        %3032 = vmatpush2.msra.mxu0 0.0
        %3033 = vmatprep.subr.mxu0 0.0
        %3034 = vmatpush2.msra.mxu0 0.0
        %3035 = vmatprep.subr.mxu0 0.0
        %3036 = vmatpush2.msra.mxu0 0.0
        %3037 = vmatprep.subr.mxu0 0.0
        %3038 = vmatpush2.msra.mxu0 0.0
        %3039 = vmatprep.subr.mxu0 0.0
        %3040 = vmatpush2.msra.mxu0 0.0
        %3041 = vmatprep.subr.mxu0 0.0
        %3042 = vmatpush2.msra.mxu0 0.0
        %3043 = vmatprep.subr.mxu0 0.0
        %3044 = vmatpush2.msra.mxu0 0.0
        %3045 = vmatprep.subr.mxu0 0.0
        %3046 = vmatpush2.msra.mxu0 0.0
        %3047 = vmatprep.subr.mxu0 0.0
        %3048 = vmatpush2.msra.mxu0 0.0
        %3049 = vmatprep.mubr.f32.mxu0 0.0
        %v3050 = vand.u32 %v1049, 4294901760
        %3051 = vmatmul.mubr.f32.gmra.mxu0 %v3050
        %v3052 = vpop.f32.mrf.mxu0
        %v3053 = vadd.f32 %v2974, %v3052
        %v3054 = vpop.f32.mrf.mxu0
        %3055 = vmatprep.mubr.f32.mxu0 0.0
        %v3056 = vand.u32 %v1052, 4294901760
        %3057 = vmatmul.mubr.f32.gmra.mxu0 %v3056
        %v3058 = vpop.f32.mrf.mxu0
        %v3059 = vadd.f32 %v2980, %v3058
        %v3060 = vpop.f32.mrf.mxu0
        %3061 = vdwg.mxu0
        %vm3062 = vcmask 97280
        %3063 = vst.msk [vmem:[%s249] sm:$0xff] %vm3062, %v1547
        %vm3064 = vcmask 93184
        %3065 = vst.msk [vmem:[%s249 + $0x8] sm:$0xf] %vm3064, %v1553
        %3066 = vst.msk [vmem:[%s249 + $0x10] sm:$0xff] %vm3062, %v2049
        %3067 = vst.msk [vmem:[%s249 + $0x18] sm:$0xf] %vm3064, %v2055
        %3068 = vst.msk [vmem:[%s249 + $0x20] sm:$0xff] %vm3062, %v2551
        %3069 = vst.msk [vmem:[%s249 + $0x28] sm:$0xf] %vm3064, %v2557
        %3070 = vst.msk [vmem:[%s249 + $0x30] sm:$0xff] %vm3062, %v3053
        %3071 = vst.msk [vmem:[%s249 + $0x38] sm:$0xf] %vm3064, %v3059
        %s3072 = smul.u32 4, %s23
        %p3073 = scmp.lt.s32.totalorder %s22, 1
        %s3074 = scalar_select %p3073, %s22, 1
        %p3075 = scmp.lt.s32.totalorder %s3072, 3
        %s3076 = scalar_select %p3075, %s3072, 3
        %s3077 = smul.addr %s3076, 2
        %s3078 = smul.addr %s3074, 8
        %s3079 = sadd.s32 %s3077, %s3078
        %s3080 = smul.addr %s3079, 8
        %s3081 = scalar_lea.vmem %s3, %s3080
        // Predicated region
        $region45: #{tpu_custom_call.1} parent=31 // pred_check
          %p3082 = pneg %p120
        $region46: #{tpu_custom_call.1} parent=31 // pred_check_branch
          %3084 = sbr.rel (%p3082) target = $region48
        $region47: #{tpu_custom_call.1} parent=31 // pred_region
          %s3085 = smul.u32 4, %s23
        $region48: #{tpu_custom_call.1} parent=31 // pred_fallthru
          _
      $region32: #{tpu_custom_call.1} parent=5 // pred_fallthru
        _
      %p3086 = scmp.le.s32.totalorder 2, %s13
      // Predicated region
      $region49: #{tpu_custom_call.1} parent=5 // pred_check
        %p3087 = pneg %p3086
      $region50: #{tpu_custom_call.1} parent=5 // pred_check_branch
        %3089 = sbr.rel (%p3087) target = $region52
      $region51: #{tpu_custom_call.1} parent=5 // pred_region
        %s3090 = ssub.s32 %s13, 2
        // Predicated region
        $region53: #{tpu_custom_call.1} parent=51 // pred_check
          %p3091 = pneg %p126
        $region54: #{tpu_custom_call.1} parent=51 // pred_check_branch
          %3093 = sbr.rel (%p3091) target = $region56
        $region55: #{tpu_custom_call.1} parent=51 // pred_region
          %s3094 = smul.u32 4, %s25
          %p3095 = scmp.lt.s32.totalorder %s24, 1
          %s3096 = scalar_select %p3095, %s24, 1
          %p3097 = scmp.lt.s32.totalorder %s3094, 3
          %s3098 = scalar_select %p3097, %s3094, 3
          %s3099 = smul.addr %s3098, 2
          %s3100 = smul.addr %s3096, 8
          %s3101 = sadd.s32 %s3099, %s3100
          %s3102 = smul.addr %s3101, 8
          %s3103 = scalar_lea.vmem %s3, %s3102
        $region56: #{tpu_custom_call.1} parent=51 // pred_fallthru
          _
      $region52: #{tpu_custom_call.1} parent=5 // pred_fallthru
        _
    $region6: #{tpu_custom_call.1} parent=1 // loop_footer
      %s17 = sadd.s32 1, %s13
    $region7: #{tpu_custom_call.1} parent=1 // loop_footer_branch
      %12 = sbr.rel target = $region3
    $region8: #{tpu_custom_call.1} parent=1 // loop_exit
      _
    %3104 = vsyncpa [#allocation3], 1
    %s3105 = scalar_lea.sflag [#allocation3], 1
    %3106 = vsyncpa %s3105, 1
    %3107 = vsyncpa [#allocation5], 1

</llo_original>
